<compile_context>
chip_gen: v5e
topology: v5e:2x2
jax: 0.10.0
libtpu: 0.0.40
codegen_flags: <defaults>
</compile_context>

<pallas_src>
import numpy as np
import jax
import jax.numpy as jnp
from jax.experimental import pallas as pl
from jax.experimental.pallas import tpu as pltpu  # noqa: F401

# ---------------- model config (small, deterministic) ----------------
B = 2          # batch
N_DEC = 8      # decoder sequence length
N_ENC = 8      # encoder sequence length
D_MODEL = 32
N_HEADS = 4
HEAD_DIM = D_MODEL // N_HEADS
D_FF = 64
SCALE = float(np.sqrt(D_MODEL / N_HEADS))
INV_SCALE = 1.0 / SCALE
LN_EPS = 1e-5

M_DEC = B * N_DEC   # flattened decoder rows (16)
M_ENC = B * N_ENC   # flattened encoder rows (16)

# ---- weight slab layout (sublane-stacked bf16, lane width 6*D = 192) ----
R_WBIG = 0                  # rows   0: 32, lanes 0:192  [Wq1/s | Wk1 | Wv1 | 0 | Wk2 | Wv2]
R_WQ2 = D_MODEL             # rows  32: 64, lanes 0:32   Wq2/s
R_WO1 = 2 * D_MODEL         # rows  64: 96, lanes 0:32   Wo1
R_WO2 = 3 * D_MODEL         # rows  96:128, lanes 0:32   Wo2
R_WF1 = 4 * D_MODEL         # rows 128:160, lanes 0:64   Wf1
R_WF2 = 5 * D_MODEL         # rows 160:224, lanes 0:32   Wf2
W_ROWS = R_WF2 + D_FF       # 224
W_LANES = 6 * D_MODEL       # 192 (K2|V2 start at lane 128 -> lane-tile aligned slice)

# ---- bias / LayerNorm slab rows (f32, lane width 192) ----
B_BIG, B_Q2, B_O1, B_O2, B_F1, B_F2 = 0, 1, 2, 3, 4, 5
B_LN1, B_LN2, B_LN3 = 6, 8, 10      # gamma at row, beta at row + 1
B_ROWS = 12

OUT_LANES = D_MODEL + N_HEADS * (M_DEC + M_ENC)   # 32 + 64 + 64 = 160


# ---------------- Pallas kernel (single invocation, whole batch) ----------------
def decoder_layer_kernel(xe_ref, mb_ref, w_ref, b_ref, out_ref):
    f32 = jnp.float32
    bf16 = jnp.bfloat16
    D = D_MODEL

    def layer_norm(v, g_row):
        g = b_ref[g_row:g_row + 1, 0:D]
        beta = b_ref[g_row + 1:g_row + 2, 0:D]
        mu = jnp.mean(v, axis=-1, keepdims=True)
        var = jnp.mean(jnp.square(v - mu), axis=-1, keepdims=True)
        return (v - mu) * jax.lax.rsqrt(var + LN_EPS) * g + beta

    def proj(a, w_row, n_out, b_row):
        # standard (rows, K) @ (K, n_out): bf16 operands, f32 accumulation, f32 bias add
        k = a.shape[-1]
        return jnp.dot(a.astype(bf16), w_ref[w_row:w_row + k, 0:n_out],
                       preferred_element_type=f32) + b_ref[b_row:b_row + 1, 0:n_out]

    def proj_t(a_t, w_row, n_out, b_row):
        # projection of an already-transposed activation a_t (K, rows) -> (rows, n_out)
        k = a_t.shape[0]
        return jax.lax.dot_general(
            a_t.astype(bf16), w_ref[w_row:w_row + k, 0:n_out],
            (((0,), (0,)), ((), ())),
            preferred_element_type=f32) + b_ref[b_row:b_row + 1, 0:n_out]

    def heads_t(p_t):
        # (D, N) -> (H, head_dim, N): leading-dim split at sublane-tile granularity (free)
        return p_t.reshape(N_HEADS, HEAD_DIM, p_t.shape[-1])

    def attention(q_t, k_t, v_t, bias):
        # q_t: (H, hd, Nq); k_t, v_t: (H, hd, Nk); bias: (H, Nq, Nk) additive (-1e10 = masked).
        # 1/scale is pre-folded into the Q projection weights in the wrapper.
        s = jax.lax.dot_general(q_t.astype(bf16), k_t.astype(bf16),
                                (((1,), (1,)), ((0,), (0,))),
                                preferred_element_type=f32) + bias          # (H, Nq, Nk)
        m = jnp.max(s, axis=-1, keepdims=True)
        e = jnp.exp(s - m)
        w = e / jnp.sum(e, axis=-1, keepdims=True)    # exact softmax: weights are a kernel output
        # V @ W^T with heads batched -> (H, hd, Nq); (H, hd) -> D merge is a free leading reshape
        attn_t = jax.lax.dot_general(v_t.astype(bf16), w.astype(bf16),
                                     (((2,), (2,)), ((0,), (0,))),
                                     preferred_element_type=f32)            # (H, hd, Nq)
        return attn_t.reshape(D, q_t.shape[-1]), w

    xe = xe_ref[...]                    # (M_DEC + M_ENC, D) f32: decoder rows then encoder rows
    x = xe[0:M_DEC, :]
    mb = mb_ref[...]                    # (H, M_DEC, M_DEC + M_ENC) additive block-diag mask bias

    # --- fused input projection (one MXU issue): [x ; enc] @ [Wq1' | Wk1 | Wv1 | 0 | Wk2 | Wv2]
    big = jnp.dot(xe.astype(bf16), w_ref[R_WBIG:R_WBIG + D, 0:W_LANES],
                  preferred_element_type=f32) + b_ref[B_BIG:B_BIG + 1, 0:W_LANES]
    qkv1 = big[0:M_DEC, 0:3 * D]                      # decoder rows -> Q1 | K1 | V1
    kv2 = big[M_DEC:M_DEC + M_ENC, 4 * D:6 * D]       # encoder rows -> K2 | V2 (lane-tile aligned)

    # --- 1) masked self-attention + residual + LayerNorm ---
    qkv1_t = jnp.transpose(qkv1)                      # (3D, M_DEC): single XLU transpose
    cat1_t, w1 = attention(heads_t(qkv1_t[0:D]),
                           heads_t(qkv1_t[D:2 * D]),
                           heads_t(qkv1_t[2 * D:3 * D]),
                           mb[:, :, 0:M_DEC])
    x1 = layer_norm(x + proj_t(cat1_t, R_WO1, D, B_O1), B_LN1)

    # --- 2) encoder-decoder attention + residual + LayerNorm ---
    q2 = proj(x1, R_WQ2, D, B_Q2)                     # (M_DEC, D), 1/scale folded in
    kv2_t = jnp.transpose(kv2)                        # (2D, M_ENC)
    cat2_t, w2 = attention(heads_t(jnp.transpose(q2)),
                           heads_t(kv2_t[0:D]),
                           heads_t(kv2_t[D:2 * D]),
                           mb[:, :, M_DEC:M_DEC + M_ENC])
    x2 = layer_norm(x1 + proj_t(cat2_t, R_WO2, D, B_O2), B_LN2)

    # --- 3) feed-forward (Linear -> ReLU -> Linear) + residual + LayerNorm ---
    h = jnp.maximum(proj(x2, R_WF1, D_FF, B_F1), 0.0)
    x3 = layer_norm(x2 + proj(h, R_WF2, D, B_F2), B_LN3)

    # --- single lane-dense merged output: [ x3 | self-attn weights | enc-dec attn weights ] ---
    out_ref[:, 0:D] = x3
    o2 = D + N_HEADS * M_DEC
    for hh in range(N_HEADS):
        out_ref[:, D + hh * M_DEC:D + (hh + 1) * M_DEC] = w1[hh]
        out_ref[:, o2 + hh * M_ENC:o2 + (hh + 1) * M_ENC] = w2[hh]


# ---------------- wrapper ----------------
def _block_diag_bias(mask):
    """(B, H, Nq, Nk) bool mask (True = masked) -> (H, B*Nq, B*Nk) additive f32 bias.
    Cross-batch blocks get -1e10 so the batch can be flattened into one sequence."""
    bsz, n_heads, nq, nk = mask.shape
    bias = jnp.where(mask, jnp.float32(-1e10), jnp.float32(0.0))        # (B, H, Nq, Nk)
    same = jnp.arange(bsz)[:, None] == jnp.arange(bsz)[None, :]         # (B, B)
    full = jnp.where(same[None, :, None, :, None],
                     jnp.transpose(bias, (1, 0, 2, 3))[:, :, :, None, :],
                     jnp.float32(-1e10))                                # (H, B, Nq, B, Nk)
    return full.reshape(n_heads, bsz * nq, bsz * nk)


def decoder_layer(x, enc_out, dec_mask, enc_dec_mask, params):
    p = params
    D = D_MODEL

    # fold 1/sqrt(head_dim) into the Q projections (zero in-kernel cost, same math)
    wq1 = p['wq1'] * INV_SCALE
    bq1 = p['bq1'] * INV_SCALE
    wq2 = p['wq2'] * INV_SCALE
    bq2 = p['bq2'] * INV_SCALE

    # --- pack all weights into one sublane-stacked bf16 slab (single DMA stream) ---
    w_slab = jnp.zeros((W_ROWS, W_LANES), jnp.float32)
    w_big = jnp.concatenate([wq1, p['wk1'], p['wv1'],
                             jnp.zeros((D, D), jnp.float32),   # pad so K2|V2 start at lane 128
                             p['wk2'], p['wv2']], axis=1)
    w_slab = w_slab.at[R_WBIG:R_WBIG + D, :].set(w_big)
    w_slab = w_slab.at[R_WQ2:R_WQ2 + D, 0:D].set(wq2)
    w_slab = w_slab.at[R_WO1:R_WO1 + D, 0:D].set(p['wo1'])
    w_slab = w_slab.at[R_WO2:R_WO2 + D, 0:D].set(p['wo2'])
    w_slab = w_slab.at[R_WF1:R_WF1 + D, 0:D_FF].set(p['wf1'])
    w_slab = w_slab.at[R_WF2:R_WF2 + D_FF, 0:D].set(p['wf2'])
    w_slab = w_slab.astype(jnp.bfloat16)

    # --- pack all biases + LayerNorm params into one f32 slab (single DMA stream) ---
    b_slab = jnp.zeros((B_ROWS, W_LANES), jnp.float32)
    b_big = jnp.concatenate([bq1, p['bk1'], p['bv1'], jnp.zeros((D,), jnp.float32),
                             p['bk2'], p['bv2']])
    b_slab = b_slab.at[B_BIG, :].set(b_big)
    b_slab = b_slab.at[B_Q2, 0:D].set(bq2)
    b_slab = b_slab.at[B_O1, 0:D].set(p['bo1'])
    b_slab = b_slab.at[B_O2, 0:D].set(p['bo2'])
    b_slab = b_slab.at[B_F1, 0:D_FF].set(p['bf1'])
    b_slab = b_slab.at[B_F2, 0:D].set(p['bf2'])
    b_slab = b_slab.at[B_LN1, 0:D].set(p['ln1_g'])
    b_slab = b_slab.at[B_LN1 + 1, 0:D].set(p['ln1_b'])
    b_slab = b_slab.at[B_LN2, 0:D].set(p['ln2_g'])
    b_slab = b_slab.at[B_LN2 + 1, 0:D].set(p['ln2_b'])
    b_slab = b_slab.at[B_LN3, 0:D].set(p['ln3_g'])
    b_slab = b_slab.at[B_LN3 + 1, 0:D].set(p['ln3_b'])

    # --- single activation slab: batch-flattened decoder rows, then encoder rows ---
    xe = jnp.concatenate([x.reshape(M_DEC, D), enc_out.reshape(M_ENC, D)], axis=0)

    # --- block-diagonal additive mask biases, lane-concatenated: (H, M_DEC, M_DEC + M_ENC) ---
    mbias = jnp.concatenate([_block_diag_bias(dec_mask), _block_diag_bias(enc_dec_mask)], axis=-1)

    out = pl.pallas_call(
        decoder_layer_kernel,
        out_shape=jax.ShapeDtypeStruct((M_DEC, OUT_LANES), jnp.float32),
    )(xe, mbias, w_slab, b_slab)

    # --- wrapper-side layout plumbing (outside the kernel) ---
    x_out = out[:, 0:D].reshape(B, N_DEC, D)
    idx = jnp.arange(B)
    a1 = out[:, D:D + N_HEADS * M_DEC].reshape(B, N_DEC, N_HEADS, B, N_DEC)
    a1 = a1[idx, :, :, idx, :].transpose(0, 2, 1, 3)       # (B, H, N_DEC, N_DEC)
    a2 = out[:, D + N_HEADS * M_DEC:].reshape(B, N_DEC, N_HEADS, B, N_ENC)
    a2 = a2[idx, :, :, idx, :].transpose(0, 2, 1, 3)       # (B, H, N_DEC, N_ENC)
    return x_out, a1, a2


# ---------------- pure JAX reference (for sanity check, full f32) ----------------
def reference(x, enc_out, dec_mask, enc_dec_mask, p):
    def ln(v, g, b):
        mu = jnp.mean(v, axis=-1, keepdims=True)
        var = jnp.mean((v - mu) ** 2, axis=-1, keepdims=True)
        return (v - mu) / jnp.sqrt(var + LN_EPS) * g + b

    def mha(qx, kvx, wq, bq, wk, bk, wv, bv, wo, bo, mask):
        q = qx @ wq + bq
        k = kvx @ wk + bk
        v = kvx @ wv + bv

        def split(t):
            bsz, n, _ = t.shape
            return t.reshape(bsz, n, N_HEADS, HEAD_DIM).transpose(0, 2, 1, 3)

        qh, kh, vh = split(q), split(k), split(v)
        score = jnp.einsum("bhnd,bhmd->bhnm", qh, kh) / SCALE
        score = jnp.where(mask, -1e10, score)
        w = jax.nn.softmax(score, axis=-1)
        attn = jnp.einsum("bhnm,bhmd->bhnd", w, vh)
        attn = attn.transpose(0, 2, 1, 3).reshape(qx.shape[0], qx.shape[1], D_MODEL)
        return attn @ wo + bo, w

    r1, a1 = mha(x, x, p['wq1'], p['bq1'], p['wk1'], p['bk1'], p['wv1'], p['bv1'],
                 p['wo1'], p['bo1'], dec_mask)
    x1 = ln(x + r1, p['ln1_g'], p['ln1_b'])
    r2, a2 = mha(x1, enc_out, p['wq2'], p['bq2'], p['wk2'], p['bk2'], p['wv2'], p['bv2'],
                 p['wo2'], p['bo2'], enc_dec_mask)
    x2 = ln(x1 + r2, p['ln2_g'], p['ln2_b'])
    ff = jnp.maximum(x2 @ p['wf1'] + p['bf1'], 0.0) @ p['wf2'] + p['bf2']
    x3 = ln(x2 + ff, p['ln3_g'], p['ln3_b'])
    return x3, a1, a2


# ---------------- parameter init ----------------
def init_params(key):
    ks = jax.random.split(key, 26)
    s = 0.1
    rn = lambda k, shape: jax.random.normal(k, shape, jnp.float32) * s
    return {
        'wq1': rn(ks[0], (D_MODEL, D_MODEL)), 'bq1': rn(ks[1], (D_MODEL,)),
        'wk1': rn(ks[2], (D_MODEL, D_MODEL)), 'bk1': rn(ks[3], (D_MODEL,)),
        'wv1': rn(ks[4], (D_MODEL, D_MODEL)), 'bv1': rn(ks[5], (D_MODEL,)),
        'wo1': rn(ks[6], (D_MODEL, D_MODEL)), 'bo1': rn(ks[7], (D_MODEL,)),
        'wq2': rn(ks[8], (D_MODEL, D_MODEL)), 'bq2': rn(ks[9], (D_MODEL,)),
        'wk2': rn(ks[10], (D_MODEL, D_MODEL)), 'bk2': rn(ks[11], (D_MODEL,)),
        'wv2': rn(ks[12], (D_MODEL, D_MODEL)), 'bv2': rn(ks[13], (D_MODEL,)),
        'wo2': rn(ks[14], (D_MODEL, D_MODEL)), 'bo2': rn(ks[15], (D_MODEL,)),
        'wf1': rn(ks[16], (D_MODEL, D_FF)), 'bf1': rn(ks[17], (D_FF,)),
        'wf2': rn(ks[18], (D_FF, D_MODEL)), 'bf2': rn(ks[19], (D_MODEL,)),
        'ln1_g': 1.0 + rn(ks[20], (D_MODEL,)), 'ln1_b': rn(ks[21], (D_MODEL,)),
        'ln2_g': 1.0 + rn(ks[22], (D_MODEL,)), 'ln2_b': rn(ks[23], (D_MODEL,)),
        'ln3_g': 1.0 + rn(ks[24], (D_MODEL,)), 'ln3_b': rn(ks[25], (D_MODEL,)),
    }


if __name__ == "__main__":
    key = jax.random.PRNGKey(0)
    kx, ke, kp = jax.random.split(key, 3)

    x = jax.random.normal(kx, (B, N_DEC, D_MODEL), jnp.float32)
    enc_out = jax.random.normal(ke, (B, N_ENC, D_MODEL), jnp.float32)

    # causal decoder mask (True = masked above the diagonal)
    causal = jnp.triu(jnp.ones((N_DEC, N_DEC), jnp.float32), k=1) > 0
    dec_mask = jnp.broadcast_to(causal[None, None], (B, N_HEADS, N_DEC, N_DEC))
    # enc-dec padding mask: batch 0 masks the last 2 encoder positions, batch 1 masks none
    pad = jnp.zeros((B, N_ENC), jnp.bool_).at[0, -2:].set(True)
    enc_dec_mask = jnp.broadcast_to(pad[:, None, None, :], (B, N_HEADS, N_DEC, N_ENC))

    params = init_params(kp)

    out_x, atten_dec, atten_ed = decoder_layer(x, enc_out, dec_mask, enc_dec_mask, params)
    jax.block_until_ready((out_x, atten_dec, atten_ed))

    ref_x, ref_a1, ref_a2 = reference(x, enc_out, dec_mask, enc_dec_mask, params)
    # bf16 matmul operands (f32 accumulation) => slightly looser tolerance than pure-f32
    np.testing.assert_allclose(np.asarray(out_x), np.asarray(ref_x), rtol=2e-2, atol=2e-2)
    np.testing.assert_allclose(np.asarray(atten_dec), np.asarray(ref_a1), rtol=2e-2, atol=2e-2)
    np.testing.assert_allclose(np.asarray(atten_ed), np.asarray(ref_a2), rtol=2e-2, atol=2e-2)

    print("KERNEL_OK")
</pallas_src>

<mosaic_0001>
module attributes {stable_mosaic.version = 11 : i64} {
  func.func @decoder_layer_kernel(%arg0: memref<32x32xf32, #tpu.memory_space<vmem>>, %arg1: memref<4x16x32xf32, #tpu.memory_space<vmem>>, %arg2: memref<224x192xbf16, #tpu.memory_space<vmem>>, %arg3: memref<12x192xf32, #tpu.memory_space<vmem>>, %arg4: memref<16x160xf32, #tpu.memory_space<vmem>>) attributes {dimension_semantics = [], scalar_prefetch = 0 : i64, scratch_operands = 0 : i64, tpu.core_type = #tpu.core_type<tc>} {
    %c0 = arith.constant 0 : index
    %c0_0 = arith.constant 0 : index
    %0 = vector.load %arg0[%c0, %c0_0] : memref<32x32xf32, #tpu.memory_space<vmem>>, vector<32x32xf32>
    %1 = vector.extract_strided_slice %0 {offsets = [0, 0], sizes = [16, 32], strides = [1, 1]} : vector<32x32xf32> to vector<16x32xf32>
    %c0_1 = arith.constant 0 : index
    %c0_2 = arith.constant 0 : index
    %c0_3 = arith.constant 0 : index
    %2 = vector.load %arg1[%c0_1, %c0_2, %c0_3] : memref<4x16x32xf32, #tpu.memory_space<vmem>>, vector<4x16x32xf32>
    %3 = arith.truncf %0 : vector<32x32xf32> to vector<32x32xbf16>
    %c0_4 = arith.constant 0 : index
    %c0_5 = arith.constant 0 : index
    %4 = vector.load %arg2[%c0_4, %c0_5] : memref<224x192xbf16, #tpu.memory_space<vmem>>, vector<32x192xbf16>
    %cst = arith.constant dense<0.000000e+00> : vector<32x192xf32>
    %5 = tpu.matmul %3, %4, %cst {dimension_numbers = #tpu.dot_dimension_numbers<[1], [0], [0], [1], [0, 0, 1, 1], [], []>} : vector<32x32xbf16>, vector<32x192xbf16>, vector<32x192xf32> -> vector<32x192xf32>
    %c0_6 = arith.constant 0 : index
    %c0_7 = arith.constant 0 : index
    %6 = vector.load %arg3[%c0_6, %c0_7] : memref<12x192xf32, #tpu.memory_space<vmem>>, vector<1x192xf32>
    %7 = vector.broadcast %6 : vector<1x192xf32> to vector<32x192xf32>
    %8 = arith.addf %5, %7 : vector<32x192xf32>
    %9 = vector.extract_strided_slice %8 {offsets = [0, 0], sizes = [16, 96], strides = [1, 1]} : vector<32x192xf32> to vector<16x96xf32>
    %10 = vector.extract_strided_slice %8 {offsets = [16, 128], sizes = [16, 64], strides = [1, 1]} : vector<32x192xf32> to vector<16x64xf32>
    %11 = tpu.transpose %9, [1, 0] : vector<16x96xf32> -> vector<96x16xf32>
    %12 = vector.extract_strided_slice %11 {offsets = [0, 0], sizes = [32, 16], strides = [1, 1]} : vector<96x16xf32> to vector<32x16xf32>
    %13 = vector.shape_cast %12 : vector<32x16xf32> to vector<4x8x16xf32>
    %14 = vector.extract_strided_slice %11 {offsets = [32, 0], sizes = [32, 16], strides = [1, 1]} : vector<96x16xf32> to vector<32x16xf32>
    %15 = vector.shape_cast %14 : vector<32x16xf32> to vector<4x8x16xf32>
    %16 = vector.extract_strided_slice %11 {offsets = [64, 0], sizes = [32, 16], strides = [1, 1]} : vector<96x16xf32> to vector<32x16xf32>
    %17 = vector.shape_cast %16 : vector<32x16xf32> to vector<4x8x16xf32>
    %18 = vector.extract_strided_slice %2 {offsets = [0, 0, 0], sizes = [4, 16, 16], strides = [1, 1, 1]} : vector<4x16x32xf32> to vector<4x16x16xf32>
    %19 = arith.truncf %13 : vector<4x8x16xf32> to vector<4x8x16xbf16>
    %20 = arith.truncf %15 : vector<4x8x16xf32> to vector<4x8x16xbf16>
    %cst_8 = arith.constant dense<0.000000e+00> : vector<4x16x16xf32>
    %21 = tpu.matmul %19, %20, %cst_8 {dimension_numbers = #tpu.dot_dimension_numbers<[1], [1], [2], [2], [0, 0, 0, 2, 1, 2], [0], [0]>} : vector<4x8x16xbf16>, vector<4x8x16xbf16>, vector<4x16x16xf32> -> vector<4x16x16xf32>
    %22 = arith.addf %21, %18 : vector<4x16x16xf32>
    %cst_9 = arith.constant dense<0xFF800000> : vector<4x16xf32>
    %23 = vector.multi_reduction <maximumf>, %22, %cst_9 [2] : vector<4x16x16xf32> to vector<4x16xf32>
    %24 = vector.shape_cast %23 : vector<4x16xf32> to vector<4x16x1xf32>
    %25 = vector.broadcast %24 : vector<4x16x1xf32> to vector<4x16x16xf32>
    %26 = arith.subf %22, %25 : vector<4x16x16xf32>
    %27 = math.exp %26 : vector<4x16x16xf32>
    %cst_10 = arith.constant dense<0.000000e+00> : vector<4x16xf32>
    %28 = vector.multi_reduction <add>, %27, %cst_10 [2] : vector<4x16x16xf32> to vector<4x16xf32>
    %29 = vector.shape_cast %28 : vector<4x16xf32> to vector<4x16x1xf32>
    %30 = vector.broadcast %29 : vector<4x16x1xf32> to vector<4x16x16xf32>
    %31 = arith.divf %27, %30 : vector<4x16x16xf32>
    %32 = arith.truncf %17 : vector<4x8x16xf32> to vector<4x8x16xbf16>
    %33 = arith.truncf %31 : vector<4x16x16xf32> to vector<4x16x16xbf16>
    %cst_11 = arith.constant dense<0.000000e+00> : vector<4x8x16xf32>
    %34 = tpu.matmul %32, %33, %cst_11 {dimension_numbers = #tpu.dot_dimension_numbers<[2], [2], [1], [1], [0, 0, 0, 1, 1, 1], [0], [0]>} : vector<4x8x16xbf16>, vector<4x16x16xbf16>, vector<4x8x16xf32> -> vector<4x8x16xf32>
    %35 = vector.shape_cast %34 : vector<4x8x16xf32> to vector<32x16xf32>
    %36 = arith.truncf %35 : vector<32x16xf32> to vector<32x16xbf16>
    %c64 = arith.constant 64 : index
    %c0_12 = arith.constant 0 : index
    %37 = vector.load %arg2[%c64, %c0_12] : memref<224x192xbf16, #tpu.memory_space<vmem>>, vector<32x32xbf16>
    %cst_13 = arith.constant dense<0.000000e+00> : vector<16x32xf32>
    %38 = tpu.matmul %36, %37, %cst_13 {dimension_numbers = #tpu.dot_dimension_numbers<[0], [0], [1], [1], [0, 1, 1, 1], [], []>} : vector<32x16xbf16>, vector<32x32xbf16>, vector<16x32xf32> -> vector<16x32xf32>
    %c2 = arith.constant 2 : index
    %c0_14 = arith.constant 0 : index
    %39 = vector.load %arg3[%c2, %c0_14] : memref<12x192xf32, #tpu.memory_space<vmem>>, vector<1x32xf32>
    %40 = vector.broadcast %39 : vector<1x32xf32> to vector<16x32xf32>
    %41 = arith.addf %38, %40 : vector<16x32xf32>
    %42 = arith.addf %1, %41 : vector<16x32xf32>
    %c6 = arith.constant 6 : index
    %c0_15 = arith.constant 0 : index
    %43 = vector.load %arg3[%c6, %c0_15] : memref<12x192xf32, #tpu.memory_space<vmem>>, vector<1x32xf32>
    %c7 = arith.constant 7 : index
    %c0_16 = arith.constant 0 : index
    %44 = vector.load %arg3[%c7, %c0_16] : memref<12x192xf32, #tpu.memory_space<vmem>>, vector<1x32xf32>
    %cst_17 = arith.constant dense<0.000000e+00> : vector<16xf32>
    %45 = vector.multi_reduction <add>, %42, %cst_17 [1] : vector<16x32xf32> to vector<16xf32>
    %46 = vector.shape_cast %45 : vector<16xf32> to vector<16x1xf32>
    %cst_18 = arith.constant 3.200000e+01 : f32
    %47 = vector.broadcast %cst_18 : f32 to vector<16x1xf32>
    %48 = arith.divf %46, %47 : vector<16x1xf32>
    %49 = vector.broadcast %48 : vector<16x1xf32> to vector<16x32xf32>
    %50 = arith.subf %42, %49 : vector<16x32xf32>
    %51 = arith.mulf %50, %50 : vector<16x32xf32>
    %cst_19 = arith.constant dense<0.000000e+00> : vector<16xf32>
    %52 = vector.multi_reduction <add>, %51, %cst_19 [1] : vector<16x32xf32> to vector<16xf32>
    %53 = vector.shape_cast %52 : vector<16xf32> to vector<16x1xf32>
    %cst_20 = arith.constant 3.200000e+01 : f32
    %54 = vector.broadcast %cst_20 : f32 to vector<16x1xf32>
    %55 = arith.divf %53, %54 : vector<16x1xf32>
    %56 = vector.broadcast %48 : vector<16x1xf32> to vector<16x32xf32>
    %57 = arith.subf %42, %56 : vector<16x32xf32>
    %cst_21 = arith.constant 9.99999974E-6 : f32
    %58 = vector.broadcast %cst_21 : f32 to vector<16x1xf32>
    %59 = arith.addf %55, %58 : vector<16x1xf32>
    %60 = math.rsqrt %59 : vector<16x1xf32>
    %61 = vector.broadcast %60 : vector<16x1xf32> to vector<16x32xf32>
    %62 = arith.mulf %57, %61 : vector<16x32xf32>
    %63 = vector.broadcast %43 : vector<1x32xf32> to vector<16x32xf32>
    %64 = arith.mulf %62, %63 : vector<16x32xf32>
    %65 = vector.broadcast %44 : vector<1x32xf32> to vector<16x32xf32>
    %66 = arith.addf %64, %65 : vector<16x32xf32>
    %67 = arith.truncf %66 : vector<16x32xf32> to vector<16x32xbf16>
    %c32 = arith.constant 32 : index
    %c0_22 = arith.constant 0 : index
    %68 = vector.load %arg2[%c32, %c0_22] : memref<224x192xbf16, #tpu.memory_space<vmem>>, vector<32x32xbf16>
    %cst_23 = arith.constant dense<0.000000e+00> : vector<16x32xf32>
    %69 = tpu.matmul %67, %68, %cst_23 {dimension_numbers = #tpu.dot_dimension_numbers<[1], [0], [0], [1], [0, 0, 1, 1], [], []>} : vector<16x32xbf16>, vector<32x32xbf16>, vector<16x32xf32> -> vector<16x32xf32>
    %c1 = arith.constant 1 : index
    %c0_24 = arith.constant 0 : index
    %70 = vector.load %arg3[%c1, %c0_24] : memref<12x192xf32, #tpu.memory_space<vmem>>, vector<1x32xf32>
    %71 = vector.broadcast %70 : vector<1x32xf32> to vector<16x32xf32>
    %72 = arith.addf %69, %71 : vector<16x32xf32>
    %73 = tpu.transpose %10, [1, 0] : vector<16x64xf32> -> vector<64x16xf32>
    %74 = tpu.transpose %72, [1, 0] : vector<16x32xf32> -> vector<32x16xf32>
    %75 = vector.shape_cast %74 : vector<32x16xf32> to vector<4x8x16xf32>
    %76 = vector.extract_strided_slice %73 {offsets = [0, 0], sizes = [32, 16], strides = [1, 1]} : vector<64x16xf32> to vector<32x16xf32>
    %77 = vector.shape_cast %76 : vector<32x16xf32> to vector<4x8x16xf32>
    %78 = vector.extract_strided_slice %73 {offsets = [32, 0], sizes = [32, 16], strides = [1, 1]} : vector<64x16xf32> to vector<32x16xf32>
    %79 = vector.shape_cast %78 : vector<32x16xf32> to vector<4x8x16xf32>
    %80 = vector.extract_strided_slice %2 {offsets = [0, 0, 16], sizes = [4, 16, 16], strides = [1, 1, 1]} : vector<4x16x32xf32> to vector<4x16x16xf32>
    %81 = arith.truncf %75 : vector<4x8x16xf32> to vector<4x8x16xbf16>
    %82 = arith.truncf %77 : vector<4x8x16xf32> to vector<4x8x16xbf16>
    %cst_25 = arith.constant dense<0.000000e+00> : vector<4x16x16xf32>
    %83 = tpu.matmul %81, %82, %cst_25 {dimension_numbers = #tpu.dot_dimension_numbers<[1], [1], [2], [2], [0, 0, 0, 2, 1, 2], [0], [0]>} : vector<4x8x16xbf16>, vector<4x8x16xbf16>, vector<4x16x16xf32> -> vector<4x16x16xf32>
    %84 = arith.addf %83, %80 : vector<4x16x16xf32>
    %cst_26 = arith.constant dense<0xFF800000> : vector<4x16xf32>
    %85 = vector.multi_reduction <maximumf>, %84, %cst_26 [2] : vector<4x16x16xf32> to vector<4x16xf32>
    %86 = vector.shape_cast %85 : vector<4x16xf32> to vector<4x16x1xf32>
    %87 = vector.broadcast %86 : vector<4x16x1xf32> to vector<4x16x16xf32>
    %88 = arith.subf %84, %87 : vector<4x16x16xf32>
    %89 = math.exp %88 : vector<4x16x16xf32>
    %cst_27 = arith.constant dense<0.000000e+00> : vector<4x16xf32>
    %90 = vector.multi_reduction <add>, %89, %cst_27 [2] : vector<4x16x16xf32> to vector<4x16xf32>
    %91 = vector.shape_cast %90 : vector<4x16xf32> to vector<4x16x1xf32>
    %92 = vector.broadcast %91 : vector<4x16x1xf32> to vector<4x16x16xf32>
    %93 = arith.divf %89, %92 : vector<4x16x16xf32>
    %94 = arith.truncf %79 : vector<4x8x16xf32> to vector<4x8x16xbf16>
    %95 = arith.truncf %93 : vector<4x16x16xf32> to vector<4x16x16xbf16>
    %cst_28 = arith.constant dense<0.000000e+00> : vector<4x8x16xf32>
    %96 = tpu.matmul %94, %95, %cst_28 {dimension_numbers = #tpu.dot_dimension_numbers<[2], [2], [1], [1], [0, 0, 0, 1, 1, 1], [0], [0]>} : vector<4x8x16xbf16>, vector<4x16x16xbf16>, vector<4x8x16xf32> -> vector<4x8x16xf32>
    %97 = vector.shape_cast %96 : vector<4x8x16xf32> to vector<32x16xf32>
    %98 = arith.truncf %97 : vector<32x16xf32> to vector<32x16xbf16>
    %c96 = arith.constant 96 : index
    %c0_29 = arith.constant 0 : index
    %99 = vector.load %arg2[%c96, %c0_29] : memref<224x192xbf16, #tpu.memory_space<vmem>>, vector<32x32xbf16>
    %cst_30 = arith.constant dense<0.000000e+00> : vector<16x32xf32>
    %100 = tpu.matmul %98, %99, %cst_30 {dimension_numbers = #tpu.dot_dimension_numbers<[0], [0], [1], [1], [0, 1, 1, 1], [], []>} : vector<32x16xbf16>, vector<32x32xbf16>, vector<16x32xf32> -> vector<16x32xf32>
    %c3 = arith.constant 3 : index
    %c0_31 = arith.constant 0 : index
    %101 = vector.load %arg3[%c3, %c0_31] : memref<12x192xf32, #tpu.memory_space<vmem>>, vector<1x32xf32>
    %102 = vector.broadcast %101 : vector<1x32xf32> to vector<16x32xf32>
    %103 = arith.addf %100, %102 : vector<16x32xf32>
    %104 = arith.addf %66, %103 : vector<16x32xf32>
    %c8 = arith.constant 8 : index
    %c0_32 = arith.constant 0 : index
    %105 = vector.load %arg3[%c8, %c0_32] : memref<12x192xf32, #tpu.memory_space<vmem>>, vector<1x32xf32>
    %c9 = arith.constant 9 : index
    %c0_33 = arith.constant 0 : index
    %106 = vector.load %arg3[%c9, %c0_33] : memref<12x192xf32, #tpu.memory_space<vmem>>, vector<1x32xf32>
    %cst_34 = arith.constant dense<0.000000e+00> : vector<16xf32>
    %107 = vector.multi_reduction <add>, %104, %cst_34 [1] : vector<16x32xf32> to vector<16xf32>
    %108 = vector.shape_cast %107 : vector<16xf32> to vector<16x1xf32>
    %cst_35 = arith.constant 3.200000e+01 : f32
    %109 = vector.broadcast %cst_35 : f32 to vector<16x1xf32>
    %110 = arith.divf %108, %109 : vector<16x1xf32>
    %111 = vector.broadcast %110 : vector<16x1xf32> to vector<16x32xf32>
    %112 = arith.subf %104, %111 : vector<16x32xf32>
    %113 = arith.mulf %112, %112 : vector<16x32xf32>
    %cst_36 = arith.constant dense<0.000000e+00> : vector<16xf32>
    %114 = vector.multi_reduction <add>, %113, %cst_36 [1] : vector<16x32xf32> to vector<16xf32>
    %115 = vector.shape_cast %114 : vector<16xf32> to vector<16x1xf32>
    %cst_37 = arith.constant 3.200000e+01 : f32
    %116 = vector.broadcast %cst_37 : f32 to vector<16x1xf32>
    %117 = arith.divf %115, %116 : vector<16x1xf32>
    %118 = vector.broadcast %110 : vector<16x1xf32> to vector<16x32xf32>
    %119 = arith.subf %104, %118 : vector<16x32xf32>
    %cst_38 = arith.constant 9.99999974E-6 : f32
    %120 = vector.broadcast %cst_38 : f32 to vector<16x1xf32>
    %121 = arith.addf %117, %120 : vector<16x1xf32>
    %122 = math.rsqrt %121 : vector<16x1xf32>
    %123 = vector.broadcast %122 : vector<16x1xf32> to vector<16x32xf32>
    %124 = arith.mulf %119, %123 : vector<16x32xf32>
    %125 = vector.broadcast %105 : vector<1x32xf32> to vector<16x32xf32>
    %126 = arith.mulf %124, %125 : vector<16x32xf32>
    %127 = vector.broadcast %106 : vector<1x32xf32> to vector<16x32xf32>
    %128 = arith.addf %126, %127 : vector<16x32xf32>
    %129 = arith.truncf %128 : vector<16x32xf32> to vector<16x32xbf16>
    %c128 = arith.constant 128 : index
    %c0_39 = arith.constant 0 : index
    %130 = vector.load %arg2[%c128, %c0_39] : memref<224x192xbf16, #tpu.memory_space<vmem>>, vector<32x64xbf16>
    %cst_40 = arith.constant dense<0.000000e+00> : vector<16x64xf32>
    %131 = tpu.matmul %129, %130, %cst_40 {dimension_numbers = #tpu.dot_dimension_numbers<[1], [0], [0], [1], [0, 0, 1, 1], [], []>} : vector<16x32xbf16>, vector<32x64xbf16>, vector<16x64xf32> -> vector<16x64xf32>
    %c4 = arith.constant 4 : index
    %c0_41 = arith.constant 0 : index
    %132 = vector.load %arg3[%c4, %c0_41] : memref<12x192xf32, #tpu.memory_space<vmem>>, vector<1x64xf32>
    %133 = vector.broadcast %132 : vector<1x64xf32> to vector<16x64xf32>
    %134 = arith.addf %131, %133 : vector<16x64xf32>
    %cst_42 = arith.constant 0.000000e+00 : f32
    %135 = vector.broadcast %cst_42 : f32 to vector<16x64xf32>
    %136 = arith.maximumf %134, %135 : vector<16x64xf32>
    %137 = arith.truncf %136 : vector<16x64xf32> to vector<16x64xbf16>
    %c160 = arith.constant 160 : index
    %c0_43 = arith.constant 0 : index
    %138 = vector.load %arg2[%c160, %c0_43] : memref<224x192xbf16, #tpu.memory_space<vmem>>, vector<64x32xbf16>
    %cst_44 = arith.constant dense<0.000000e+00> : vector<16x32xf32>
    %139 = tpu.matmul %137, %138, %cst_44 {dimension_numbers = #tpu.dot_dimension_numbers<[1], [0], [0], [1], [0, 0, 1, 1], [], []>} : vector<16x64xbf16>, vector<64x32xbf16>, vector<16x32xf32> -> vector<16x32xf32>
    %c5 = arith.constant 5 : index
    %c0_45 = arith.constant 0 : index
    %140 = vector.load %arg3[%c5, %c0_45] : memref<12x192xf32, #tpu.memory_space<vmem>>, vector<1x32xf32>
    %141 = vector.broadcast %140 : vector<1x32xf32> to vector<16x32xf32>
    %142 = arith.addf %139, %141 : vector<16x32xf32>
    %143 = arith.addf %128, %142 : vector<16x32xf32>
    %c10 = arith.constant 10 : index
    %c0_46 = arith.constant 0 : index
    %144 = vector.load %arg3[%c10, %c0_46] : memref<12x192xf32, #tpu.memory_space<vmem>>, vector<1x32xf32>
    %c11 = arith.constant 11 : index
    %c0_47 = arith.constant 0 : index
    %145 = vector.load %arg3[%c11, %c0_47] : memref<12x192xf32, #tpu.memory_space<vmem>>, vector<1x32xf32>
    %cst_48 = arith.constant dense<0.000000e+00> : vector<16xf32>
    %146 = vector.multi_reduction <add>, %143, %cst_48 [1] : vector<16x32xf32> to vector<16xf32>
    %147 = vector.shape_cast %146 : vector<16xf32> to vector<16x1xf32>
    %cst_49 = arith.constant 3.200000e+01 : f32
    %148 = vector.broadcast %cst_49 : f32 to vector<16x1xf32>
    %149 = arith.divf %147, %148 : vector<16x1xf32>
    %150 = vector.broadcast %149 : vector<16x1xf32> to vector<16x32xf32>
    %151 = arith.subf %143, %150 : vector<16x32xf32>
    %152 = arith.mulf %151, %151 : vector<16x32xf32>
    %cst_50 = arith.constant dense<0.000000e+00> : vector<16xf32>
    %153 = vector.multi_reduction <add>, %152, %cst_50 [1] : vector<16x32xf32> to vector<16xf32>
    %154 = vector.shape_cast %153 : vector<16xf32> to vector<16x1xf32>
    %cst_51 = arith.constant 3.200000e+01 : f32
    %155 = vector.broadcast %cst_51 : f32 to vector<16x1xf32>
    %156 = arith.divf %154, %155 : vector<16x1xf32>
    %157 = vector.broadcast %149 : vector<16x1xf32> to vector<16x32xf32>
    %158 = arith.subf %143, %157 : vector<16x32xf32>
    %cst_52 = arith.constant 9.99999974E-6 : f32
    %159 = vector.broadcast %cst_52 : f32 to vector<16x1xf32>
    %160 = arith.addf %156, %159 : vector<16x1xf32>
    %161 = math.rsqrt %160 : vector<16x1xf32>
    %162 = vector.broadcast %161 : vector<16x1xf32> to vector<16x32xf32>
    %163 = arith.mulf %158, %162 : vector<16x32xf32>
    %164 = vector.broadcast %144 : vector<1x32xf32> to vector<16x32xf32>
    %165 = arith.mulf %163, %164 : vector<16x32xf32>
    %166 = vector.broadcast %145 : vector<1x32xf32> to vector<16x32xf32>
    %167 = arith.addf %165, %166 : vector<16x32xf32>
    %c0_53 = arith.constant 0 : index
    %c0_54 = arith.constant 0 : index
    %168 = vector.load %arg4[%c0_53, %c0_54] : memref<16x160xf32, #tpu.memory_space<vmem>>, vector<16x32xf32>
    tpu.vector_store %arg4[%c0_53, %c0_54], %167 {strides = array<i32>} : memref<16x160xf32, #tpu.memory_space<vmem>>, vector<16x32xf32>,
    %169 = vector.extract_strided_slice %31 {offsets = [0, 0, 0], sizes = [1, 16, 16], strides = [1, 1, 1]} : vector<4x16x16xf32> to vector<1x16x16xf32>
    %170 = vector.shape_cast %169 : vector<1x16x16xf32> to vector<16x16xf32>
    %c0_55 = arith.constant 0 : index
    %c32_56 = arith.constant 32 : index
    %171 = vector.load %arg4[%c0_55, %c32_56] : memref<16x160xf32, #tpu.memory_space<vmem>>, vector<16x16xf32>
    tpu.vector_store %arg4[%c0_55, %c32_56], %170 {strides = array<i32>} : memref<16x160xf32, #tpu.memory_space<vmem>>, vector<16x16xf32>,
    %172 = vector.extract_strided_slice %93 {offsets = [0, 0, 0], sizes = [1, 16, 16], strides = [1, 1, 1]} : vector<4x16x16xf32> to vector<1x16x16xf32>
    %173 = vector.shape_cast %172 : vector<1x16x16xf32> to vector<16x16xf32>
    %c0_57 = arith.constant 0 : index
    %c96_58 = arith.constant 96 : index
    %174 = vector.load %arg4[%c0_57, %c96_58] : memref<16x160xf32, #tpu.memory_space<vmem>>, vector<16x16xf32>
    tpu.vector_store %arg4[%c0_57, %c96_58], %173 {strides = array<i32>} : memref<16x160xf32, #tpu.memory_space<vmem>>, vector<16x16xf32>,
    %175 = vector.extract_strided_slice %31 {offsets = [1, 0, 0], sizes = [1, 16, 16], strides = [1, 1, 1]} : vector<4x16x16xf32> to vector<1x16x16xf32>
    %176 = vector.shape_cast %175 : vector<1x16x16xf32> to vector<16x16xf32>
    %c0_59 = arith.constant 0 : index
    %c48 = arith.constant 48 : index
    %177 = vector.load %arg4[%c0_59, %c48] : memref<16x160xf32, #tpu.memory_space<vmem>>, vector<16x16xf32>
    tpu.vector_store %arg4[%c0_59, %c48], %176 {strides = array<i32>} : memref<16x160xf32, #tpu.memory_space<vmem>>, vector<16x16xf32>,
    %178 = vector.extract_strided_slice %93 {offsets = [1, 0, 0], sizes = [1, 16, 16], strides = [1, 1, 1]} : vector<4x16x16xf32> to vector<1x16x16xf32>
    %179 = vector.shape_cast %178 : vector<1x16x16xf32> to vector<16x16xf32>
    %c0_60 = arith.constant 0 : index
    %c112 = arith.constant 112 : index
    %180 = vector.load %arg4[%c0_60, %c112] : memref<16x160xf32, #tpu.memory_space<vmem>>, vector<16x16xf32>
    tpu.vector_store %arg4[%c0_60, %c112], %179 {strides = array<i32>} : memref<16x160xf32, #tpu.memory_space<vmem>>, vector<16x16xf32>,
    %181 = vector.extract_strided_slice %31 {offsets = [2, 0, 0], sizes = [1, 16, 16], strides = [1, 1, 1]} : vector<4x16x16xf32> to vector<1x16x16xf32>
    %182 = vector.shape_cast %181 : vector<1x16x16xf32> to vector<16x16xf32>
    %c0_61 = arith.constant 0 : index
    %c64_62 = arith.constant 64 : index
    %183 = vector.load %arg4[%c0_61, %c64_62] : memref<16x160xf32, #tpu.memory_space<vmem>>, vector<16x16xf32>
    tpu.vector_store %arg4[%c0_61, %c64_62], %182 {strides = array<i32>} : memref<16x160xf32, #tpu.memory_space<vmem>>, vector<16x16xf32>,
    %184 = vector.extract_strided_slice %93 {offsets = [2, 0, 0], sizes = [1, 16, 16], strides = [1, 1, 1]} : vector<4x16x16xf32> to vector<1x16x16xf32>
    %185 = vector.shape_cast %184 : vector<1x16x16xf32> to vector<16x16xf32>
    %c0_63 = arith.constant 0 : index
    %c128_64 = arith.constant 128 : index
    %186 = vector.load %arg4[%c0_63, %c128_64] : memref<16x160xf32, #tpu.memory_space<vmem>>, vector<16x16xf32>
    tpu.vector_store %arg4[%c0_63, %c128_64], %185 {strides = array<i32>} : memref<16x160xf32, #tpu.memory_space<vmem>>, vector<16x16xf32>,
    %187 = vector.extract_strided_slice %31 {offsets = [3, 0, 0], sizes = [1, 16, 16], strides = [1, 1, 1]} : vector<4x16x16xf32> to vector<1x16x16xf32>
    %188 = vector.shape_cast %187 : vector<1x16x16xf32> to vector<16x16xf32>
    %c0_65 = arith.constant 0 : index
    %c80 = arith.constant 80 : index
    %189 = vector.load %arg4[%c0_65, %c80] : memref<16x160xf32, #tpu.memory_space<vmem>>, vector<16x16xf32>
    tpu.vector_store %arg4[%c0_65, %c80], %188 {strides = array<i32>} : memref<16x160xf32, #tpu.memory_space<vmem>>, vector<16x16xf32>,
    %190 = vector.extract_strided_slice %93 {offsets = [3, 0, 0], sizes = [1, 16, 16], strides = [1, 1, 1]} : vector<4x16x16xf32> to vector<1x16x16xf32>
    %191 = vector.shape_cast %190 : vector<1x16x16xf32> to vector<16x16xf32>
    %c0_66 = arith.constant 0 : index
    %c144 = arith.constant 144 : index
    %192 = vector.load %arg4[%c0_66, %c144] : memref<16x160xf32, #tpu.memory_space<vmem>>, vector<16x16xf32>
    tpu.vector_store %arg4[%c0_66, %c144], %191 {strides = array<i32>} : memref<16x160xf32, #tpu.memory_space<vmem>>, vector<16x16xf32>,
    return
  }
}

</mosaic_0001>

<llo_original>
// kernel: tpu_custom_call.1
$region0: #{tpu_custom_call.1}
  #allocation0 [shape = 'u32[]', space=smem, size = 0x4, offset = 0x4, fixed_abs, tag = 'smem constant byte address 0x4 - core index']
  #allocation1 [shape = 'u32[72,128]{1,0:T(1,128)}', space=vmem, size = 0x9000, scoped, tag = 'internal scratch']
  %s0 = inlined_call_operand.vmem [shape: f32[32,32], index: 0, kind: input, shape index: {}]
  %s1 = inlined_call_operand.vmem [shape: f32[4,16,32], index: 1, kind: input, shape index: {}]
  %s2 = inlined_call_operand.vmem [shape: bf16[224,192], index: 2, kind: input, shape index: {}]
  %s3 = inlined_call_operand.vmem [shape: f32[12,192], index: 3, kind: input, shape index: {}]
  %s4 = inlined_call_operand.hbm [shape: f32[16,160], index: 4, kind: output, shape index: {}]
  %s5 = sld [smem:[#allocation0]]
  $region26: #{tpu_custom_call.1} parent=0
    _
  %s7 = ssub.s32 1, %s5
  %s8 = scalar_select 0, %s7, %s5
  $region1: #{tpu_custom_call.1} parent=0
    #allocation2 [shape = 'u8[16384]{0}', space=vmem, size = 0x4000, scoped, tag = 'output window, operand 0, single buffered']
    #allocation3 [shape = 's32[1]{0}', space=sflag, size = 0x4, scoped, tag = 'scoped memory for tpu_custom_call.1']
    %9 = vsyncpa [#allocation3], 0
    // Predicated region
    $region2: #{tpu_custom_call.1} parent=1 // pred_check
      _
    $region3: #{tpu_custom_call.1} parent=1 // pred_check_branch
      %11 = sbr.rel (0) target = $region5
    $region4: #{tpu_custom_call.1} parent=1 // pred_region
      _
    $region5: #{tpu_custom_call.1} parent=1 // pred_fallthru
      _
    // Predicated region
    $region6: #{tpu_custom_call.1} parent=1 // pred_check
      _
    $region7: #{tpu_custom_call.1} parent=1 // pred_check_branch
      %13 = sbr.rel (0) target = $region9
    $region8: #{tpu_custom_call.1} parent=1 // pred_region
      _
    $region9: #{tpu_custom_call.1} parent=1 // pred_fallthru
      _
    // Predicated region
    $region10: #{tpu_custom_call.1} parent=1 // pred_check
      _
    $region11: #{tpu_custom_call.1} parent=1 // pred_check_branch
      %15 = sbr.rel (0) target = $region13
    $region12: #{tpu_custom_call.1} parent=1 // pred_region
      _
    $region13: #{tpu_custom_call.1} parent=1 // pred_fallthru
      _
    // Predicated region
    $region14: #{tpu_custom_call.1} parent=1 // pred_check
      _
    $region15: #{tpu_custom_call.1} parent=1 // pred_check_branch
      %17 = sbr.rel (0) target = $region17
    $region16: #{tpu_custom_call.1} parent=1 // pred_region
      _
    $region17: #{tpu_custom_call.1} parent=1 // pred_fallthru
      _
    %v19 = vld [vmem:[%s0] sm:$0xff]
    %v20 = vld [vmem:[%s0 + $0x8] sm:$0xff]
    %v21 = vld [vmem:[%s0 + $0x10] sm:$0xff]
    %v22 = vld [vmem:[%s0 + $0x18] sm:$0xff]
    %v23 = vld [vmem:[%s1] sm:$0xff]
    %v24 = vld [vmem:[%s1 + $0x8] sm:$0xff]
    %v25 = vld [vmem:[%s1 + $0x10] sm:$0xff]
    %v26 = vld [vmem:[%s1 + $0x18] sm:$0xff]
    %v27 = vld [vmem:[%s1 + $0x20] sm:$0xff]
    %v28 = vld [vmem:[%s1 + $0x28] sm:$0xff]
    %v29 = vld [vmem:[%s1 + $0x30] sm:$0xff]
    %v30 = vld [vmem:[%s1 + $0x38] sm:$0xff]
    %v31 = vpack.c.bf16 %v20, %v19
    %v32 = vpack.c.bf16 %v22, %v21
    %v33 = vld [vmem:[%s2] sm:$0xff]
    %v34 = vld [vmem:[%s2 + $0x8] sm:$0xff]
    %v35 = vld [vmem:[%s2 + $0x10] sm:$0xff]
    %v36 = vld [vmem:[%s2 + $0x18] sm:$0xff]
    %v37 = vld [vmem:[%s3] ss:$8 sm:$0x3]
    %v39 = vperm.slane %v37, 0
    %v40 = vperm.slane %v37, 1
    %v47 = vunpack.c.l.b16 %v33
    %v48 = vunpack.c.h.b16 %v33
    %v49 = vunpack.c.l.b16 %v34
    %v50 = vunpack.c.h.b16 %v34
    %v51 = vunpack.c.l.b16 %v35
    %v52 = vunpack.c.h.b16 %v35
    %v53 = vunpack.c.l.b16 %v36
    %v54 = vunpack.c.h.b16 %v36
    %v55 = vpack.c.b16 %v49, %v47
    %v56 = vpack.c.b16 %v50, %v48
    %v57 = vpack.c.b16 %v53, %v51
    %v58 = vpack.c.b16 %v54, %v52
    %vm63 = vcmask 261120
    %v65 = vsel %vm63, %v31, 0
    %v68 = vsel %vm63, %v32, 0
    %70 = vmatpush.bf16.msra.mxu0 0
    %71 = vmatpush.bf16.msra.mxu0 0
    %72 = vmatpush.bf16.msra.mxu0 0
    %73 = vmatpush.bf16.msra.mxu0 0
    %74 = vmatpush.bf16.msra.mxu0 0
    %75 = vmatpush.bf16.msra.mxu0 0
    %76 = vmatpush.bf16.msra.mxu0 %v57
    %77 = vmatpush.bf16.msra.mxu0 %v55
    %78 = vmatmul.bf16.gmra.mxu0 %v65
    %v79 = vpop.f32.mrf.mxu0
    %v80 = vadd.f32 %v39, %v79
    %v81 = vpop.f32.mrf.mxu0
    %v82 = vadd.f32 %v39, %v81
    %83 = vmatmul.bf16.gmra.mxu0 %v68
    %v84 = vpop.f32.mrf.mxu0
    %v85 = vpop.f32.mrf.mxu0
    %86 = vdwg.mxu0
    %87 = vmatpush.bf16.msra.mxu0 0
    %88 = vmatpush.bf16.msra.mxu0 0
    %89 = vmatpush.bf16.msra.mxu0 0
    %90 = vmatpush.bf16.msra.mxu0 0
    %91 = vmatpush.bf16.msra.mxu0 0
    %92 = vmatpush.bf16.msra.mxu0 0
    %93 = vmatpush.bf16.msra.mxu0 %v58
    %94 = vmatpush.bf16.msra.mxu0 %v56
    %95 = vmatmul.bf16.gmra.mxu0 %v65
    %v96 = vpop.f32.mrf.mxu0
    %v97 = vpop.f32.mrf.mxu0
    %98 = vmatmul.bf16.gmra.mxu0 %v68
    %v99 = vpop.f32.mrf.mxu0
    %v100 = vadd.f32 %v40, %v99
    %v101 = vpop.f32.mrf.mxu0
    %v102 = vadd.f32 %v40, %v101
    %103 = vdwg.mxu0
    %104 = vxpose.xlu0.b32.start [1/16] %v80, 128
    %105 = vxpose.xlu0.b32.cont [2/16] %v82, 128
    %106 = vxpose.xlu0.b32.cont [3/16] 0.0, 128
    %107 = vxpose.xlu0.b32.cont [4/16] 0.0, 128
    %108 = vxpose.xlu0.b32.cont [5/16] 0.0, 128
    %109 = vxpose.xlu0.b32.cont [6/16] 0.0, 128
    %110 = vxpose.xlu0.b32.cont [7/16] 0.0, 128
    %111 = vxpose.xlu0.b32.cont [8/16] 0.0, 128
    %112 = vxpose.xlu0.b32.cont [9/16] 0.0, 128
    %113 = vxpose.xlu0.b32.cont [10/16] 0.0, 128
    %114 = vxpose.xlu0.b32.cont [11/16] 0.0, 128
    %115 = vxpose.xlu0.b32.cont [12/16] 0.0, 128
    %116 = vxpose.xlu0.b32.cont [13/16] 0.0, 128
    %117 = vxpose.xlu0.b32.cont [14/16] 0.0, 128
    %118 = vxpose.xlu0.b32.cont [15/16] 0.0, 128
    %119 = vxpose.xlu0.b32.end [16/16] 0.0, 128
    %v120 = vpop.trf.xlu0
    %v121 = vpop.trf.xlu0
    %v122 = vpop.trf.xlu0
    %v123 = vpop.trf.xlu0
    %v124 = vpop.trf.xlu0
    %v125 = vpop.trf.xlu0
    %v126 = vpop.trf.xlu0
    %v127 = vpop.trf.xlu0
    %v128 = vpop.trf.xlu0
    %v129 = vpop.trf.xlu0
    %v130 = vpop.trf.xlu0
    %v131 = vpop.trf.xlu0
    %v132 = vpop.trf.xlu0
    %v133 = vpop.trf.xlu0
    %v134 = vpop.trf.xlu0
    %v135 = vpop.trf.xlu0
    %v136 = vpack.c.bf16 %v120, %v120
    %v137 = vpack.c.bf16 %v121, %v121
    %v138 = vpack.c.bf16 %v122, %v122
    %v139 = vpack.c.bf16 %v123, %v123
    %v140 = vpack.c.bf16 %v124, %v124
    %v141 = vpack.c.bf16 %v125, %v125
    %v142 = vpack.c.bf16 %v126, %v126
    %v143 = vpack.c.bf16 %v127, %v127
    %144 = vxpose.xlu0.c.b16.start [1/8] %v136, 128
    %145 = vxpose.xlu0.c.b16.cont [2/8] 0, 128
    %146 = vxpose.xlu0.c.b16.cont [3/8] 0, 128
    %147 = vxpose.xlu0.c.b16.cont [4/8] 0, 128
    %148 = vxpose.xlu0.c.b16.cont [5/8] 0, 128
    %149 = vxpose.xlu0.c.b16.cont [6/8] 0, 128
    %150 = vxpose.xlu0.c.b16.cont [7/8] 0, 128
    %151 = vxpose.xlu0.c.b16.end [8/8] 0, 128
    %v152 = vpop.trf.xlu0
    %v153 = vpop.trf.xlu0
    %v154 = vpop.trf.xlu0
    %v155 = vpop.trf.xlu0
    %v156 = vpop.trf.xlu0
    %v157 = vpop.trf.xlu0
    %v158 = vpop.trf.xlu0
    %v159 = vpop.trf.xlu0
    %vm160 = vcmask 64512
    %v162 = vsel %vm160, %v152, 0
    %vm164 = vcmask 1043456
    %v166 = vsel %vm164, %v140, 0
    %168 = vmatpush.bf16.msra.mxu0 0
    %169 = vmatpush.bf16.msra.mxu0 0
    %170 = vmatpush.bf16.msra.mxu0 0
    %171 = vmatpush.bf16.msra.mxu0 0
    %172 = vmatpush.bf16.msra.mxu0 0
    %173 = vmatpush.bf16.msra.mxu0 0
    %174 = vmatpush.bf16.msra.mxu0 0
    %175 = vmatpush.bf16.msra.mxu0 %v166
    %176 = vmatmul.bf16.gmra.mxu0 %v162
    %v177 = vpop.f32.mrf.mxu0
    %v178 = vadd.f32 %v23, %v177
    %v179 = vpop.f32.mrf.mxu0
    %v180 = vadd.f32 %v24, %v179
    %181 = vdwg.mxu0
    %182 = vxpose.xlu0.c.b16.start [1/8] %v137, 128
    %183 = vxpose.xlu0.c.b16.cont [2/8] 0, 128
    %184 = vxpose.xlu0.c.b16.cont [3/8] 0, 128
    %185 = vxpose.xlu0.c.b16.cont [4/8] 0, 128
    %186 = vxpose.xlu0.c.b16.cont [5/8] 0, 128
    %187 = vxpose.xlu0.c.b16.cont [6/8] 0, 128
    %188 = vxpose.xlu0.c.b16.cont [7/8] 0, 128
    %189 = vxpose.xlu0.c.b16.end [8/8] 0, 128
    %v190 = vpop.trf.xlu0
    %v191 = vpop.trf.xlu0
    %v192 = vpop.trf.xlu0
    %v193 = vpop.trf.xlu0
    %v194 = vpop.trf.xlu0
    %v195 = vpop.trf.xlu0
    %v196 = vpop.trf.xlu0
    %v197 = vpop.trf.xlu0
    %v199 = vsel %vm160, %v190, 0
    %v202 = vsel %vm164, %v141, 0
    %204 = vmatpush.bf16.msra.mxu0 0
    %205 = vmatpush.bf16.msra.mxu0 0
    %206 = vmatpush.bf16.msra.mxu0 0
    %207 = vmatpush.bf16.msra.mxu0 0
    %208 = vmatpush.bf16.msra.mxu0 0
    %209 = vmatpush.bf16.msra.mxu0 0
    %210 = vmatpush.bf16.msra.mxu0 0
    %211 = vmatpush.bf16.msra.mxu0 %v202
    %212 = vmatmul.bf16.gmra.mxu0 %v199
    %v213 = vpop.f32.mrf.mxu0
    %v214 = vadd.f32 %v25, %v213
    %v215 = vpop.f32.mrf.mxu0
    %v216 = vadd.f32 %v26, %v215
    %217 = vdwg.mxu0
    %218 = vxpose.xlu0.c.b16.start [1/8] %v138, 128
    %219 = vxpose.xlu0.c.b16.cont [2/8] 0, 128
    %220 = vxpose.xlu0.c.b16.cont [3/8] 0, 128
    %221 = vxpose.xlu0.c.b16.cont [4/8] 0, 128
    %222 = vxpose.xlu0.c.b16.cont [5/8] 0, 128
    %223 = vxpose.xlu0.c.b16.cont [6/8] 0, 128
    %224 = vxpose.xlu0.c.b16.cont [7/8] 0, 128
    %225 = vxpose.xlu0.c.b16.end [8/8] 0, 128
    %v226 = vpop.trf.xlu0
    %v227 = vpop.trf.xlu0
    %v228 = vpop.trf.xlu0
    %v229 = vpop.trf.xlu0
    %v230 = vpop.trf.xlu0
    %v231 = vpop.trf.xlu0
    %v232 = vpop.trf.xlu0
    %v233 = vpop.trf.xlu0
    %v235 = vsel %vm160, %v226, 0
    %v238 = vsel %vm164, %v142, 0
    %240 = vmatpush.bf16.msra.mxu0 0
    %241 = vmatpush.bf16.msra.mxu0 0
    %242 = vmatpush.bf16.msra.mxu0 0
    %243 = vmatpush.bf16.msra.mxu0 0
    %244 = vmatpush.bf16.msra.mxu0 0
    %245 = vmatpush.bf16.msra.mxu0 0
    %246 = vmatpush.bf16.msra.mxu0 0
    %247 = vmatpush.bf16.msra.mxu0 %v238
    %248 = vmatmul.bf16.gmra.mxu0 %v235
    %v249 = vpop.f32.mrf.mxu0
    %v250 = vadd.f32 %v27, %v249
    %v251 = vpop.f32.mrf.mxu0
    %v252 = vadd.f32 %v28, %v251
    %253 = vdwg.mxu0
    %254 = vxpose.xlu0.c.b16.start [1/8] %v139, 128
    %255 = vxpose.xlu0.c.b16.cont [2/8] 0, 128
    %256 = vxpose.xlu0.c.b16.cont [3/8] 0, 128
    %257 = vxpose.xlu0.c.b16.cont [4/8] 0, 128
    %258 = vxpose.xlu0.c.b16.cont [5/8] 0, 128
    %259 = vxpose.xlu0.c.b16.cont [6/8] 0, 128
    %260 = vxpose.xlu0.c.b16.cont [7/8] 0, 128
    %261 = vxpose.xlu0.c.b16.end [8/8] 0, 128
    %v262 = vpop.trf.xlu0
    %v263 = vpop.trf.xlu0
    %v264 = vpop.trf.xlu0
    %v265 = vpop.trf.xlu0
    %v266 = vpop.trf.xlu0
    %v267 = vpop.trf.xlu0
    %v268 = vpop.trf.xlu0
    %v269 = vpop.trf.xlu0
    %v271 = vsel %vm160, %v262, 0
    %v274 = vsel %vm164, %v143, 0
    %276 = vmatpush.bf16.msra.mxu0 0
    %277 = vmatpush.bf16.msra.mxu0 0
    %278 = vmatpush.bf16.msra.mxu0 0
    %279 = vmatpush.bf16.msra.mxu0 0
    %280 = vmatpush.bf16.msra.mxu0 0
    %281 = vmatpush.bf16.msra.mxu0 0
    %282 = vmatpush.bf16.msra.mxu0 0
    %283 = vmatpush.bf16.msra.mxu0 %v274
    %284 = vmatmul.bf16.gmra.mxu0 %v271
    %v285 = vpop.f32.mrf.mxu0
    %v286 = vadd.f32 %v29, %v285
    %v287 = vpop.f32.mrf.mxu0
    %v288 = vadd.f32 %v30, %v287
    %289 = vdwg.mxu0
    %vm290 = vcmask 130048
    %v291 = vsel %vm290, %v178, -inf
    %292 = vmax.xlane.f32.xlu0 %v291
    %v293 = vpop.xlane.xlu0 %292
    %v294 = vsel %vm290, %v180, -inf
    %295 = vmax.xlane.f32.xlu0 %v294
    %v296 = vpop.xlane.xlu0 %295
    %v297 = vsel %vm290, %v214, -inf
    %298 = vmax.xlane.f32.xlu0 %v297
    %v299 = vpop.xlane.xlu0 %298
    %v300 = vsel %vm290, %v216, -inf
    %301 = vmax.xlane.f32.xlu0 %v300
    %v302 = vpop.xlane.xlu0 %301
    %v303 = vsel %vm290, %v250, -inf
    %304 = vmax.xlane.f32.xlu0 %v303
    %v305 = vpop.xlane.xlu0 %304
    %v306 = vsel %vm290, %v252, -inf
    %307 = vmax.xlane.f32.xlu0 %v306
    %v308 = vpop.xlane.xlu0 %307
    %v309 = vsel %vm290, %v286, -inf
    %310 = vmax.xlane.f32.xlu0 %v309
    %v311 = vpop.xlane.xlu0 %310
    %v312 = vsel %vm290, %v288, -inf
    %313 = vmax.xlane.f32.xlu0 %v312
    %v314 = vpop.xlane.xlu0 %313
    %v315 = vsub.f32 %v178, %v293
    %v316 = vsub.f32 %v180, %v296
    %v317 = vsub.f32 %v214, %v299
    %v318 = vsub.f32 %v216, %v302
    %v319 = vsub.f32 %v250, %v305
    %v320 = vsub.f32 %v252, %v308
    %v321 = vsub.f32 %v286, %v311
    %v322 = vsub.f32 %v288, %v314
    %v323 = vmul.f32 %v315, 1.442695
    %v324 = vpow.pop %v323
    %v325 = vmul.f32 %v316, 1.442695
    %v326 = vpow.pop %v325
    %v327 = vmul.f32 %v317, 1.442695
    %v328 = vpow.pop %v327
    %v329 = vmul.f32 %v318, 1.442695
    %v330 = vpow.pop %v329
    %v331 = vmul.f32 %v319, 1.442695
    %v332 = vpow.pop %v331
    %v333 = vmul.f32 %v320, 1.442695
    %v334 = vpow.pop %v333
    %v335 = vmul.f32 %v321, 1.442695
    %v336 = vpow.pop %v335
    %v337 = vmul.f32 %v322, 1.442695
    %v338 = vpow.pop %v337
    %v339 = vsel %vm290, %v324, 0.0
    %340 = vadd.xlane.f32.xlu0 %v339
    %v341 = vpop.xlane.xlu0 %340
    %v342 = vsel %vm290, %v326, 0.0
    %343 = vadd.xlane.f32.xlu0 %v342
    %v344 = vpop.xlane.xlu0 %343
    %v345 = vsel %vm290, %v328, 0.0
    %346 = vadd.xlane.f32.xlu0 %v345
    %v347 = vpop.xlane.xlu0 %346
    %v348 = vsel %vm290, %v330, 0.0
    %349 = vadd.xlane.f32.xlu0 %v348
    %v350 = vpop.xlane.xlu0 %349
    %v351 = vsel %vm290, %v332, 0.0
    %352 = vadd.xlane.f32.xlu0 %v351
    %v353 = vpop.xlane.xlu0 %352
    %v354 = vsel %vm290, %v334, 0.0
    %355 = vadd.xlane.f32.xlu0 %v354
    %v356 = vpop.xlane.xlu0 %355
    %v357 = vsel %vm290, %v336, 0.0
    %358 = vadd.xlane.f32.xlu0 %v357
    %v359 = vpop.xlane.xlu0 %358
    %v360 = vsel %vm290, %v338, 0.0
    %361 = vadd.xlane.f32.xlu0 %v360
    %v362 = vpop.xlane.xlu0 %361
    %v363 = vrcp.pop %v341
    %v364 = vmul.f32 %v341, %v363
    %v365 = vsub.f32 1.0, %v364
    %v366 = vmul.f32 %v363, %v365
    %v367 = vadd.f32 %v363, %v366
    %vm368 = vweird.f32 %v341
    %vm369 = vweird.f32 %v363
    %vm370 = vmor %vm368, %vm369
    %v371 = vsel %vm370, %v363, %v367
    %v372 = vand.u32 2147483647, %v341
    %vm373 = vcmp.eq.f32.partialorder %v372, 8.507059e+37
    %v374 = vand.u32 %v341, 2147483648
    %v375 = vor.u32 1.1754944e-38, %v374
    %v376 = vsel %vm373, %v375, %v371
    %v377 = vmul.f32 %v324, %v376
    %v378 = vrcp.pop %v344
    %v379 = vmul.f32 %v344, %v378
    %v380 = vsub.f32 1.0, %v379
    %v381 = vmul.f32 %v378, %v380
    %v382 = vadd.f32 %v378, %v381
    %vm383 = vweird.f32 %v344
    %vm384 = vweird.f32 %v378
    %vm385 = vmor %vm383, %vm384
    %v386 = vsel %vm385, %v378, %v382
    %v387 = vand.u32 2147483647, %v344
    %vm388 = vcmp.eq.f32.partialorder %v387, 8.507059e+37
    %v389 = vand.u32 %v344, 2147483648
    %v390 = vor.u32 1.1754944e-38, %v389
    %v391 = vsel %vm388, %v390, %v386
    %v392 = vmul.f32 %v326, %v391
    %v393 = vrcp.pop %v347
    %v394 = vmul.f32 %v347, %v393
    %v395 = vsub.f32 1.0, %v394
    %v396 = vmul.f32 %v393, %v395
    %v397 = vadd.f32 %v393, %v396
    %vm398 = vweird.f32 %v347
    %vm399 = vweird.f32 %v393
    %vm400 = vmor %vm398, %vm399
    %v401 = vsel %vm400, %v393, %v397
    %v402 = vand.u32 2147483647, %v347
    %vm403 = vcmp.eq.f32.partialorder %v402, 8.507059e+37
    %v404 = vand.u32 %v347, 2147483648
    %v405 = vor.u32 1.1754944e-38, %v404
    %v406 = vsel %vm403, %v405, %v401
    %v407 = vmul.f32 %v328, %v406
    %v408 = vrcp.pop %v350
    %v409 = vmul.f32 %v350, %v408
    %v410 = vsub.f32 1.0, %v409
    %v411 = vmul.f32 %v408, %v410
    %v412 = vadd.f32 %v408, %v411
    %vm413 = vweird.f32 %v350
    %vm414 = vweird.f32 %v408
    %vm415 = vmor %vm413, %vm414
    %v416 = vsel %vm415, %v408, %v412
    %v417 = vand.u32 2147483647, %v350
    %vm418 = vcmp.eq.f32.partialorder %v417, 8.507059e+37
    %v419 = vand.u32 %v350, 2147483648
    %v420 = vor.u32 1.1754944e-38, %v419
    %v421 = vsel %vm418, %v420, %v416
    %v422 = vmul.f32 %v330, %v421
    %v423 = vrcp.pop %v353
    %v424 = vmul.f32 %v353, %v423
    %v425 = vsub.f32 1.0, %v424
    %v426 = vmul.f32 %v423, %v425
    %v427 = vadd.f32 %v423, %v426
    %vm428 = vweird.f32 %v353
    %vm429 = vweird.f32 %v423
    %vm430 = vmor %vm428, %vm429
    %v431 = vsel %vm430, %v423, %v427
    %v432 = vand.u32 2147483647, %v353
    %vm433 = vcmp.eq.f32.partialorder %v432, 8.507059e+37
    %v434 = vand.u32 %v353, 2147483648
    %v435 = vor.u32 1.1754944e-38, %v434
    %v436 = vsel %vm433, %v435, %v431
    %v437 = vmul.f32 %v332, %v436
    %v438 = vrcp.pop %v356
    %v439 = vmul.f32 %v356, %v438
    %v440 = vsub.f32 1.0, %v439
    %v441 = vmul.f32 %v438, %v440
    %v442 = vadd.f32 %v438, %v441
    %vm443 = vweird.f32 %v356
    %vm444 = vweird.f32 %v438
    %vm445 = vmor %vm443, %vm444
    %v446 = vsel %vm445, %v438, %v442
    %v447 = vand.u32 2147483647, %v356
    %vm448 = vcmp.eq.f32.partialorder %v447, 8.507059e+37
    %v449 = vand.u32 %v356, 2147483648
    %v450 = vor.u32 1.1754944e-38, %v449
    %v451 = vsel %vm448, %v450, %v446
    %v452 = vmul.f32 %v334, %v451
    %v453 = vrcp.pop %v359
    %v454 = vmul.f32 %v359, %v453
    %v455 = vsub.f32 1.0, %v454
    %v456 = vmul.f32 %v453, %v455
    %v457 = vadd.f32 %v453, %v456
    %vm458 = vweird.f32 %v359
    %vm459 = vweird.f32 %v453
    %vm460 = vmor %vm458, %vm459
    %v461 = vsel %vm460, %v453, %v457
    %v462 = vand.u32 2147483647, %v359
    %vm463 = vcmp.eq.f32.partialorder %v462, 8.507059e+37
    %v464 = vand.u32 %v359, 2147483648
    %v465 = vor.u32 1.1754944e-38, %v464
    %v466 = vsel %vm463, %v465, %v461
    %v467 = vmul.f32 %v336, %v466
    %v468 = vrcp.pop %v362
    %v469 = vmul.f32 %v362, %v468
    %v470 = vsub.f32 1.0, %v469
    %v471 = vmul.f32 %v468, %v470
    %v472 = vadd.f32 %v468, %v471
    %vm473 = vweird.f32 %v362
    %vm474 = vweird.f32 %v468
    %vm475 = vmor %vm473, %vm474
    %v476 = vsel %vm475, %v468, %v472
    %v477 = vand.u32 2147483647, %v362
    %vm478 = vcmp.eq.f32.partialorder %v477, 8.507059e+37
    %v479 = vand.u32 %v362, 2147483648
    %v480 = vor.u32 1.1754944e-38, %v479
    %v481 = vsel %vm478, %v480, %v476
    %v482 = vmul.f32 %v338, %v481
    %v483 = vpack.c.bf16 %v128, %v128
    %v484 = vpack.c.bf16 %v129, %v129
    %v485 = vpack.c.bf16 %v130, %v130
    %v486 = vpack.c.bf16 %v131, %v131
    %v487 = vpack.c.bf16 %v377, %v377
    %v488 = vpack.c.bf16 %v392, %v392
    %v489 = vpack.c.bf16 %v407, %v407
    %v490 = vpack.c.bf16 %v422, %v422
    %v491 = vpack.c.bf16 %v437, %v437
    %v492 = vpack.c.bf16 %v452, %v452
    %v493 = vpack.c.bf16 %v467, %v467
    %v494 = vpack.c.bf16 %v482, %v482
    %v497 = vunpack.c.l.b16 %v487
    %v498 = vunpack.c.l.b16 %v488
    %v499 = vpack.c.b16 %v498, %v497
    %v501 = vsel %vm290, %v483, 0
    %v504 = vsel %vm290, %v499, 0
    %506 = vmatpush.bf16.xpose.msra.mxu0 0
    %507 = vmatpush.bf16.xpose.msra.mxu0 0
    %508 = vmatpush.bf16.xpose.msra.mxu0 0
    %509 = vmatpush.bf16.xpose.msra.mxu0 0
    %510 = vmatpush.bf16.xpose.msra.mxu0 0
    %511 = vmatpush.bf16.xpose.msra.mxu0 0
    %512 = vmatpush.bf16.xpose.msra.mxu0 0
    %513 = vmatpush.bf16.xpose.msra.mxu0 %v504
    %514 = vmatmul.bf16.gmra.mxu0 %v501
    %v515 = vpop.f32.mrf.mxu0
    %v516 = vadd.f32 0.0, %v515
    %v517 = vpop.f32.mrf.mxu0
    %518 = vdwg.mxu0
    %v521 = vunpack.c.l.b16 %v489
    %v522 = vunpack.c.l.b16 %v490
    %v523 = vpack.c.b16 %v522, %v521
    %v525 = vsel %vm290, %v484, 0
    %v528 = vsel %vm290, %v523, 0
    %530 = vmatpush.bf16.xpose.msra.mxu0 0
    %531 = vmatpush.bf16.xpose.msra.mxu0 0
    %532 = vmatpush.bf16.xpose.msra.mxu0 0
    %533 = vmatpush.bf16.xpose.msra.mxu0 0
    %534 = vmatpush.bf16.xpose.msra.mxu0 0
    %535 = vmatpush.bf16.xpose.msra.mxu0 0
    %536 = vmatpush.bf16.xpose.msra.mxu0 0
    %537 = vmatpush.bf16.xpose.msra.mxu0 %v528
    %538 = vmatmul.bf16.gmra.mxu0 %v525
    %v539 = vpop.f32.mrf.mxu0
    %v540 = vadd.f32 0.0, %v539
    %v541 = vpop.f32.mrf.mxu0
    %542 = vdwg.mxu0
    %v545 = vunpack.c.l.b16 %v491
    %v546 = vunpack.c.l.b16 %v492
    %v547 = vpack.c.b16 %v546, %v545
    %v549 = vsel %vm290, %v485, 0
    %v552 = vsel %vm290, %v547, 0
    %554 = vmatpush.bf16.xpose.msra.mxu0 0
    %555 = vmatpush.bf16.xpose.msra.mxu0 0
    %556 = vmatpush.bf16.xpose.msra.mxu0 0
    %557 = vmatpush.bf16.xpose.msra.mxu0 0
    %558 = vmatpush.bf16.xpose.msra.mxu0 0
    %559 = vmatpush.bf16.xpose.msra.mxu0 0
    %560 = vmatpush.bf16.xpose.msra.mxu0 0
    %561 = vmatpush.bf16.xpose.msra.mxu0 %v552
    %562 = vmatmul.bf16.gmra.mxu0 %v549
    %v563 = vpop.f32.mrf.mxu0
    %v564 = vadd.f32 0.0, %v563
    %v565 = vpop.f32.mrf.mxu0
    %566 = vdwg.mxu0
    %v569 = vunpack.c.l.b16 %v493
    %v570 = vunpack.c.l.b16 %v494
    %v571 = vpack.c.b16 %v570, %v569
    %v573 = vsel %vm290, %v486, 0
    %v576 = vsel %vm290, %v571, 0
    %578 = vmatpush.bf16.xpose.msra.mxu0 0
    %579 = vmatpush.bf16.xpose.msra.mxu0 0
    %580 = vmatpush.bf16.xpose.msra.mxu0 0
    %581 = vmatpush.bf16.xpose.msra.mxu0 0
    %582 = vmatpush.bf16.xpose.msra.mxu0 0
    %583 = vmatpush.bf16.xpose.msra.mxu0 0
    %584 = vmatpush.bf16.xpose.msra.mxu0 0
    %585 = vmatpush.bf16.xpose.msra.mxu0 %v576
    %586 = vmatmul.bf16.gmra.mxu0 %v573
    %v587 = vpop.f32.mrf.mxu0
    %v588 = vadd.f32 0.0, %v587
    %v589 = vpop.f32.mrf.mxu0
    %590 = vdwg.mxu0
    %v591 = vpack.c.bf16 %v540, %v516
    %v592 = vpack.c.bf16 %v588, %v564
    %v593 = vld [vmem:[%s2 + $0x40] sm:$0xf]
    %v594 = vld [vmem:[%s2 + $0x48] sm:$0xf]
    %v595 = vld [vmem:[%s2 + $0x50] sm:$0xf]
    %v596 = vld [vmem:[%s2 + $0x58] sm:$0xf]
    %v597 = vld [vmem:[%s3 + $0x2] ss:$0 sm:$0xff]
    %598 = vxpose.xlu0.c.b16.start [1/8] %v591, 128
    %599 = vxpose.xlu0.c.b16.cont [2/8] %v592, 128
    %600 = vxpose.xlu0.c.b16.cont [3/8] 0, 128
    %601 = vxpose.xlu0.c.b16.cont [4/8] 0, 128
    %602 = vxpose.xlu0.c.b16.cont [5/8] 0, 128
    %603 = vxpose.xlu0.c.b16.cont [6/8] 0, 128
    %604 = vxpose.xlu0.c.b16.cont [7/8] 0, 128
    %605 = vxpose.xlu0.c.b16.end [8/8] 0, 128
    %v606 = vpop.trf.xlu0
    %v607 = vpop.trf.xlu0
    %v608 = vpop.trf.xlu0
    %v609 = vpop.trf.xlu0
    %v610 = vpop.trf.xlu0
    %v611 = vpop.trf.xlu0
    %v612 = vpop.trf.xlu0
    %v613 = vpop.trf.xlu0
    %v618 = vunpack.c.l.b16 %v593
    %v619 = vunpack.c.l.b16 %v594
    %v620 = vunpack.c.l.b16 %v595
    %v621 = vunpack.c.l.b16 %v596
    %v622 = vpack.c.b16 %v619, %v618
    %v623 = vpack.c.b16 %v621, %v620
    %v627 = vsel %vm63, %v606, 0
    %629 = vmatpush.bf16.msra.mxu0 0
    %630 = vmatpush.bf16.msra.mxu0 0
    %631 = vmatpush.bf16.msra.mxu0 0
    %632 = vmatpush.bf16.msra.mxu0 0
    %633 = vmatpush.bf16.msra.mxu0 0
    %634 = vmatpush.bf16.msra.mxu0 0
    %635 = vmatpush.bf16.msra.mxu0 %v623
    %636 = vmatpush.bf16.msra.mxu0 %v622
    %637 = vmatmul.bf16.gmra.mxu0 %v627
    %v638 = vpop.f32.mrf.mxu0
    %v639 = vadd.f32 %v597, %v638
    %v640 = vpop.f32.mrf.mxu0
    %v641 = vadd.f32 %v597, %v640
    %642 = vdwg.mxu0
    %v643 = vadd.f32 %v19, %v639
    %v644 = vadd.f32 %v20, %v641
    %v645 = vld [vmem:[%s3 + $0x6] ss:$0 sm:$0xff]
    %v646 = vld [vmem:[%s3 + $0x7] ss:$0 sm:$0xff]
    %v647 = vsel %vm63, %v643, 0.0
    %648 = vadd.xlane.f32.xlu0 %v647
    %v649 = vpop.xlane.xlu0 %648
    %v650 = vsel %vm63, %v644, 0.0
    %651 = vadd.xlane.f32.xlu0 %v650
    %v652 = vpop.xlane.xlu0 %651
    %v653 = vrcp.pop 32.0
    %v654 = vmul.f32 32.0, %v653
    %v655 = vsub.f32 1.0, %v654
    %v656 = vmul.f32 %v653, %v655
    %v657 = vadd.f32 %v653, %v656
    %vm658 = vweird.f32 %v653
    %v659 = vsel %vm658, %v653, %v657
    %v660 = vmul.f32 %v649, %v659
    %v661 = vmul.f32 %v652, %v659
    %v662 = vsub.f32 %v643, %v660
    %v663 = vsub.f32 %v644, %v661
    %v664 = vmul.f32 %v662, %v662
    %v665 = vmul.f32 %v663, %v663
    %v666 = vsel %vm63, %v664, 0.0
    %667 = vadd.xlane.f32.xlu0 %v666
    %v668 = vpop.xlane.xlu0 %667
    %v669 = vsel %vm63, %v665, 0.0
    %670 = vadd.xlane.f32.xlu0 %v669
    %v671 = vpop.xlane.xlu0 %670
    %v672 = vmul.f32 %v668, %v659
    %v673 = vmul.f32 %v671, %v659
    %v674 = vadd.f32 %v672, 1e-05
    %v675 = vadd.f32 %v673, 1e-05
    %v676 = vrsqrt.pop %v674
    %v677 = vmul.f32 %v676, %v674
    %v678 = vmul.f32 %v677, %v676
    %v679 = vmul.f32 0.5, %v678
    %v680 = vsub.f32 1.5, %v679
    %v681 = vmul.f32 %v676, %v680
    %vm682 = vweird.f32 %v674
    %vm683 = vweird.f32 %v676
    %vm684 = vmor %vm682, %vm683
    %v685 = vsel %vm684, %v676, %v681
    %v686 = vrsqrt.pop %v675
    %v687 = vmul.f32 %v686, %v675
    %v688 = vmul.f32 %v687, %v686
    %v689 = vmul.f32 0.5, %v688
    %v690 = vsub.f32 1.5, %v689
    %v691 = vmul.f32 %v686, %v690
    %vm692 = vweird.f32 %v675
    %vm693 = vweird.f32 %v686
    %vm694 = vmor %vm692, %vm693
    %v695 = vsel %vm694, %v686, %v691
    %v696 = vmul.f32 %v662, %v685
    %v697 = vmul.f32 %v663, %v695
    %v698 = vmul.f32 %v696, %v645
    %v699 = vmul.f32 %v697, %v645
    %v700 = vadd.f32 %v698, %v646
    %v701 = vadd.f32 %v699, %v646
    %v702 = vpack.c.bf16 %v701, %v700
    %v703 = vld [vmem:[%s2 + $0x20] sm:$0xf]
    %v704 = vld [vmem:[%s2 + $0x28] sm:$0xf]
    %v705 = vld [vmem:[%s2 + $0x30] sm:$0xf]
    %v706 = vld [vmem:[%s2 + $0x38] sm:$0xf]
    %v707 = vld [vmem:[%s3 + $0x1] ss:$0 sm:$0xff]
    %v712 = vunpack.c.l.b16 %v703
    %v713 = vunpack.c.l.b16 %v704
    %v714 = vunpack.c.l.b16 %v705
    %v715 = vunpack.c.l.b16 %v706
    %v716 = vpack.c.b16 %v713, %v712
    %v717 = vpack.c.b16 %v715, %v714
    %v721 = vsel %vm63, %v702, 0
    %723 = vmatpush.bf16.msra.mxu0 0
    %724 = vmatpush.bf16.msra.mxu0 0
    %725 = vmatpush.bf16.msra.mxu0 0
    %726 = vmatpush.bf16.msra.mxu0 0
    %727 = vmatpush.bf16.msra.mxu0 0
    %728 = vmatpush.bf16.msra.mxu0 0
    %729 = vmatpush.bf16.msra.mxu0 %v717
    %730 = vmatpush.bf16.msra.mxu0 %v716
    %731 = vmatmul.bf16.gmra.mxu0 %v721
    %v732 = vpop.f32.mrf.mxu0
    %v733 = vadd.f32 %v707, %v732
    %v734 = vpop.f32.mrf.mxu0
    %v735 = vadd.f32 %v707, %v734
    %736 = vdwg.mxu0
    %737 = vxpose.xlu0.b32.start [1/16] %v100, 128
    %738 = vxpose.xlu0.b32.cont [2/16] %v102, 128
    %739 = vxpose.xlu0.b32.cont [3/16] 0.0, 128
    %740 = vxpose.xlu0.b32.cont [4/16] 0.0, 128
    %741 = vxpose.xlu0.b32.cont [5/16] 0.0, 128
    %742 = vxpose.xlu0.b32.cont [6/16] 0.0, 128
    %743 = vxpose.xlu0.b32.cont [7/16] 0.0, 128
    %744 = vxpose.xlu0.b32.cont [8/16] 0.0, 128
    %745 = vxpose.xlu0.b32.cont [9/16] 0.0, 128
    %746 = vxpose.xlu0.b32.cont [10/16] 0.0, 128
    %747 = vxpose.xlu0.b32.cont [11/16] 0.0, 128
    %748 = vxpose.xlu0.b32.cont [12/16] 0.0, 128
    %749 = vxpose.xlu0.b32.cont [13/16] 0.0, 128
    %750 = vxpose.xlu0.b32.cont [14/16] 0.0, 128
    %751 = vxpose.xlu0.b32.cont [15/16] 0.0, 128
    %752 = vxpose.xlu0.b32.end [16/16] 0.0, 128
    %v753 = vpop.trf.xlu0
    %v754 = vpop.trf.xlu0
    %v755 = vpop.trf.xlu0
    %v756 = vpop.trf.xlu0
    %v757 = vpop.trf.xlu0
    %v758 = vpop.trf.xlu0
    %v759 = vpop.trf.xlu0
    %v760 = vpop.trf.xlu0
    %v761 = vpop.trf.xlu0
    %v762 = vpop.trf.xlu0
    %v763 = vpop.trf.xlu0
    %v764 = vpop.trf.xlu0
    %v765 = vpop.trf.xlu0
    %v766 = vpop.trf.xlu0
    %v767 = vpop.trf.xlu0
    %v768 = vpop.trf.xlu0
    %769 = vxpose.xlu0.b32.start [1/16] %v733, 128
    %770 = vxpose.xlu0.b32.cont [2/16] %v735, 128
    %771 = vxpose.xlu0.b32.cont [3/16] 0.0, 128
    %772 = vxpose.xlu0.b32.cont [4/16] 0.0, 128
    %773 = vxpose.xlu0.b32.cont [5/16] 0.0, 128
    %774 = vxpose.xlu0.b32.cont [6/16] 0.0, 128
    %775 = vxpose.xlu0.b32.cont [7/16] 0.0, 128
    %776 = vxpose.xlu0.b32.cont [8/16] 0.0, 128
    %777 = vxpose.xlu0.b32.cont [9/16] 0.0, 128
    %778 = vxpose.xlu0.b32.cont [10/16] 0.0, 128
    %779 = vxpose.xlu0.b32.cont [11/16] 0.0, 128
    %780 = vxpose.xlu0.b32.cont [12/16] 0.0, 128
    %781 = vxpose.xlu0.b32.cont [13/16] 0.0, 128
    %782 = vxpose.xlu0.b32.cont [14/16] 0.0, 128
    %783 = vxpose.xlu0.b32.cont [15/16] 0.0, 128
    %784 = vxpose.xlu0.b32.end [16/16] 0.0, 128
    %v785 = vpop.trf.xlu0
    %v786 = vpop.trf.xlu0
    %v787 = vpop.trf.xlu0
    %v788 = vpop.trf.xlu0
    %v789 = vpop.trf.xlu0
    %v790 = vpop.trf.xlu0
    %v791 = vpop.trf.xlu0
    %v792 = vpop.trf.xlu0
    %v793 = vpop.trf.xlu0
    %v794 = vpop.trf.xlu0
    %v795 = vpop.trf.xlu0
    %v796 = vpop.trf.xlu0
    %v797 = vpop.trf.xlu0
    %v798 = vpop.trf.xlu0
    %v799 = vpop.trf.xlu0
    %v800 = vpop.trf.xlu0
    %v801 = vpack.c.bf16 %v785, %v785
    %v802 = vpack.c.bf16 %v786, %v786
    %v803 = vpack.c.bf16 %v787, %v787
    %v804 = vpack.c.bf16 %v788, %v788
    %v805 = vpack.c.bf16 %v753, %v753
    %v806 = vpack.c.bf16 %v754, %v754
    %v807 = vpack.c.bf16 %v755, %v755
    %v808 = vpack.c.bf16 %v756, %v756
    %809 = vxpose.xlu0.c.b16.start [1/8] %v801, 128
    %810 = vxpose.xlu0.c.b16.cont [2/8] 0, 128
    %811 = vxpose.xlu0.c.b16.cont [3/8] 0, 128
    %812 = vxpose.xlu0.c.b16.cont [4/8] 0, 128
    %813 = vxpose.xlu0.c.b16.cont [5/8] 0, 128
    %814 = vxpose.xlu0.c.b16.cont [6/8] 0, 128
    %815 = vxpose.xlu0.c.b16.cont [7/8] 0, 128
    %816 = vxpose.xlu0.c.b16.end [8/8] 0, 128
    %v817 = vpop.trf.xlu0
    %v818 = vpop.trf.xlu0
    %v819 = vpop.trf.xlu0
    %v820 = vpop.trf.xlu0
    %v821 = vpop.trf.xlu0
    %v822 = vpop.trf.xlu0
    %v823 = vpop.trf.xlu0
    %v824 = vpop.trf.xlu0
    %827 = vrot.lane.b32.xlu0 %v23, 112
    %v828 = vpop.permute.xlu0 %827
    %829 = vrot.lane.b32.xlu0 %v24, 112
    %v830 = vpop.permute.xlu0 %829
    %v834 = vsel %vm160, %v817, 0
    %v837 = vsel %vm164, %v805, 0
    %839 = vmatpush.bf16.msra.mxu0 0
    %840 = vmatpush.bf16.msra.mxu0 0
    %841 = vmatpush.bf16.msra.mxu0 0
    %842 = vmatpush.bf16.msra.mxu0 0
    %843 = vmatpush.bf16.msra.mxu0 0
    %844 = vmatpush.bf16.msra.mxu0 0
    %845 = vmatpush.bf16.msra.mxu0 0
    %846 = vmatpush.bf16.msra.mxu0 %v837
    %847 = vmatmul.bf16.gmra.mxu0 %v834
    %v848 = vpop.f32.mrf.mxu0
    %v849 = vadd.f32 %v828, %v848
    %v850 = vpop.f32.mrf.mxu0
    %v851 = vadd.f32 %v830, %v850
    %852 = vdwg.mxu0
    %853 = vxpose.xlu0.c.b16.start [1/8] %v802, 128
    %854 = vxpose.xlu0.c.b16.cont [2/8] 0, 128
    %855 = vxpose.xlu0.c.b16.cont [3/8] 0, 128
    %856 = vxpose.xlu0.c.b16.cont [4/8] 0, 128
    %857 = vxpose.xlu0.c.b16.cont [5/8] 0, 128
    %858 = vxpose.xlu0.c.b16.cont [6/8] 0, 128
    %859 = vxpose.xlu0.c.b16.cont [7/8] 0, 128
    %860 = vxpose.xlu0.c.b16.end [8/8] 0, 128
    %v861 = vpop.trf.xlu0
    %v862 = vpop.trf.xlu0
    %v863 = vpop.trf.xlu0
    %v864 = vpop.trf.xlu0
    %v865 = vpop.trf.xlu0
    %v866 = vpop.trf.xlu0
    %v867 = vpop.trf.xlu0
    %v868 = vpop.trf.xlu0
    %871 = vrot.lane.b32.xlu0 %v25, 112
    %v872 = vpop.permute.xlu0 %871
    %873 = vrot.lane.b32.xlu0 %v26, 112
    %v874 = vpop.permute.xlu0 %873
    %v878 = vsel %vm160, %v861, 0
    %v881 = vsel %vm164, %v806, 0
    %883 = vmatpush.bf16.msra.mxu0 0
    %884 = vmatpush.bf16.msra.mxu0 0
    %885 = vmatpush.bf16.msra.mxu0 0
    %886 = vmatpush.bf16.msra.mxu0 0
    %887 = vmatpush.bf16.msra.mxu0 0
    %888 = vmatpush.bf16.msra.mxu0 0
    %889 = vmatpush.bf16.msra.mxu0 0
    %890 = vmatpush.bf16.msra.mxu0 %v881
    %891 = vmatmul.bf16.gmra.mxu0 %v878
    %v892 = vpop.f32.mrf.mxu0
    %v893 = vadd.f32 %v872, %v892
    %v894 = vpop.f32.mrf.mxu0
    %v895 = vadd.f32 %v874, %v894
    %896 = vdwg.mxu0
    %897 = vxpose.xlu0.c.b16.start [1/8] %v803, 128
    %898 = vxpose.xlu0.c.b16.cont [2/8] 0, 128
    %899 = vxpose.xlu0.c.b16.cont [3/8] 0, 128
    %900 = vxpose.xlu0.c.b16.cont [4/8] 0, 128
    %901 = vxpose.xlu0.c.b16.cont [5/8] 0, 128
    %902 = vxpose.xlu0.c.b16.cont [6/8] 0, 128
    %903 = vxpose.xlu0.c.b16.cont [7/8] 0, 128
    %904 = vxpose.xlu0.c.b16.end [8/8] 0, 128
    %v905 = vpop.trf.xlu0
    %v906 = vpop.trf.xlu0
    %v907 = vpop.trf.xlu0
    %v908 = vpop.trf.xlu0
    %v909 = vpop.trf.xlu0
    %v910 = vpop.trf.xlu0
    %v911 = vpop.trf.xlu0
    %v912 = vpop.trf.xlu0
    %915 = vrot.lane.b32.xlu0 %v27, 112
    %v916 = vpop.permute.xlu0 %915
    %917 = vrot.lane.b32.xlu0 %v28, 112
    %v918 = vpop.permute.xlu0 %917
    %v922 = vsel %vm160, %v905, 0
    %v925 = vsel %vm164, %v807, 0
    %927 = vmatpush.bf16.msra.mxu0 0
    %928 = vmatpush.bf16.msra.mxu0 0
    %929 = vmatpush.bf16.msra.mxu0 0
    %930 = vmatpush.bf16.msra.mxu0 0
    %931 = vmatpush.bf16.msra.mxu0 0
    %932 = vmatpush.bf16.msra.mxu0 0
    %933 = vmatpush.bf16.msra.mxu0 0
    %934 = vmatpush.bf16.msra.mxu0 %v925
    %935 = vmatmul.bf16.gmra.mxu0 %v922
    %v936 = vpop.f32.mrf.mxu0
    %v937 = vadd.f32 %v916, %v936
    %v938 = vpop.f32.mrf.mxu0
    %v939 = vadd.f32 %v918, %v938
    %940 = vdwg.mxu0
    %941 = vxpose.xlu0.c.b16.start [1/8] %v804, 128
    %942 = vxpose.xlu0.c.b16.cont [2/8] 0, 128
    %943 = vxpose.xlu0.c.b16.cont [3/8] 0, 128
    %944 = vxpose.xlu0.c.b16.cont [4/8] 0, 128
    %945 = vxpose.xlu0.c.b16.cont [5/8] 0, 128
    %946 = vxpose.xlu0.c.b16.cont [6/8] 0, 128
    %947 = vxpose.xlu0.c.b16.cont [7/8] 0, 128
    %948 = vxpose.xlu0.c.b16.end [8/8] 0, 128
    %v949 = vpop.trf.xlu0
    %v950 = vpop.trf.xlu0
    %v951 = vpop.trf.xlu0
    %v952 = vpop.trf.xlu0
    %v953 = vpop.trf.xlu0
    %v954 = vpop.trf.xlu0
    %v955 = vpop.trf.xlu0
    %v956 = vpop.trf.xlu0
    %959 = vrot.lane.b32.xlu0 %v29, 112
    %v960 = vpop.permute.xlu0 %959
    %961 = vrot.lane.b32.xlu0 %v30, 112
    %v962 = vpop.permute.xlu0 %961
    %v966 = vsel %vm160, %v949, 0
    %v969 = vsel %vm164, %v808, 0
    %971 = vmatpush.bf16.msra.mxu0 0
    %972 = vmatpush.bf16.msra.mxu0 0
    %973 = vmatpush.bf16.msra.mxu0 0
    %974 = vmatpush.bf16.msra.mxu0 0
    %975 = vmatpush.bf16.msra.mxu0 0
    %976 = vmatpush.bf16.msra.mxu0 0
    %977 = vmatpush.bf16.msra.mxu0 0
    %978 = vmatpush.bf16.msra.mxu0 %v969
    %979 = vmatmul.bf16.gmra.mxu0 %v966
    %v980 = vpop.f32.mrf.mxu0
    %v981 = vadd.f32 %v960, %v980
    %v982 = vpop.f32.mrf.mxu0
    %v983 = vadd.f32 %v962, %v982
    %984 = vdwg.mxu0
    %v985 = vsel %vm290, %v849, -inf
    %986 = vmax.xlane.f32.xlu0 %v985
    %v987 = vpop.xlane.xlu0 %986
    %v988 = vsel %vm290, %v851, -inf
    %989 = vmax.xlane.f32.xlu0 %v988
    %v990 = vpop.xlane.xlu0 %989
    %v991 = vsel %vm290, %v893, -inf
    %992 = vmax.xlane.f32.xlu0 %v991
    %v993 = vpop.xlane.xlu0 %992
    %v994 = vsel %vm290, %v895, -inf
    %995 = vmax.xlane.f32.xlu0 %v994
    %v996 = vpop.xlane.xlu0 %995
    %v997 = vsel %vm290, %v937, -inf
    %998 = vmax.xlane.f32.xlu0 %v997
    %v999 = vpop.xlane.xlu0 %998
    %v1000 = vsel %vm290, %v939, -inf
    %1001 = vmax.xlane.f32.xlu0 %v1000
    %v1002 = vpop.xlane.xlu0 %1001
    %v1003 = vsel %vm290, %v981, -inf
    %1004 = vmax.xlane.f32.xlu0 %v1003
    %v1005 = vpop.xlane.xlu0 %1004
    %v1006 = vsel %vm290, %v983, -inf
    %1007 = vmax.xlane.f32.xlu0 %v1006
    %v1008 = vpop.xlane.xlu0 %1007
    %v1009 = vsub.f32 %v849, %v987
    %v1010 = vsub.f32 %v851, %v990
    %v1011 = vsub.f32 %v893, %v993
    %v1012 = vsub.f32 %v895, %v996
    %v1013 = vsub.f32 %v937, %v999
    %v1014 = vsub.f32 %v939, %v1002
    %v1015 = vsub.f32 %v981, %v1005
    %v1016 = vsub.f32 %v983, %v1008
    %v1017 = vmul.f32 %v1009, 1.442695
    %v1018 = vpow.pop %v1017
    %v1019 = vmul.f32 %v1010, 1.442695
    %v1020 = vpow.pop %v1019
    %v1021 = vmul.f32 %v1011, 1.442695
    %v1022 = vpow.pop %v1021
    %v1023 = vmul.f32 %v1012, 1.442695
    %v1024 = vpow.pop %v1023
    %v1025 = vmul.f32 %v1013, 1.442695
    %v1026 = vpow.pop %v1025
    %v1027 = vmul.f32 %v1014, 1.442695
    %v1028 = vpow.pop %v1027
    %v1029 = vmul.f32 %v1015, 1.442695
    %v1030 = vpow.pop %v1029
    %v1031 = vmul.f32 %v1016, 1.442695
    %v1032 = vpow.pop %v1031
    %v1033 = vsel %vm290, %v1018, 0.0
    %1034 = vadd.xlane.f32.xlu0 %v1033
    %v1035 = vpop.xlane.xlu0 %1034
    %v1036 = vsel %vm290, %v1020, 0.0
    %1037 = vadd.xlane.f32.xlu0 %v1036
    %v1038 = vpop.xlane.xlu0 %1037
    %v1039 = vsel %vm290, %v1022, 0.0
    %1040 = vadd.xlane.f32.xlu0 %v1039
    %v1041 = vpop.xlane.xlu0 %1040
    %v1042 = vsel %vm290, %v1024, 0.0
    %1043 = vadd.xlane.f32.xlu0 %v1042
    %v1044 = vpop.xlane.xlu0 %1043
    %v1045 = vsel %vm290, %v1026, 0.0
    %1046 = vadd.xlane.f32.xlu0 %v1045
    %v1047 = vpop.xlane.xlu0 %1046
    %v1048 = vsel %vm290, %v1028, 0.0
    %1049 = vadd.xlane.f32.xlu0 %v1048
    %v1050 = vpop.xlane.xlu0 %1049
    %v1051 = vsel %vm290, %v1030, 0.0
    %1052 = vadd.xlane.f32.xlu0 %v1051
    %v1053 = vpop.xlane.xlu0 %1052
    %v1054 = vsel %vm290, %v1032, 0.0
    %1055 = vadd.xlane.f32.xlu0 %v1054
    %v1056 = vpop.xlane.xlu0 %1055
    %v1057 = vrcp.pop %v1035
    %v1058 = vmul.f32 %v1035, %v1057
    %v1059 = vsub.f32 1.0, %v1058
    %v1060 = vmul.f32 %v1057, %v1059
    %v1061 = vadd.f32 %v1057, %v1060
    %vm1062 = vweird.f32 %v1035
    %vm1063 = vweird.f32 %v1057
    %vm1064 = vmor %vm1062, %vm1063
    %v1065 = vsel %vm1064, %v1057, %v1061
    %v1066 = vand.u32 2147483647, %v1035
    %vm1067 = vcmp.eq.f32.partialorder %v1066, 8.507059e+37
    %v1068 = vand.u32 %v1035, 2147483648
    %v1069 = vor.u32 1.1754944e-38, %v1068
    %v1070 = vsel %vm1067, %v1069, %v1065
    %v1071 = vmul.f32 %v1018, %v1070
    %v1072 = vrcp.pop %v1038
    %v1073 = vmul.f32 %v1038, %v1072
    %v1074 = vsub.f32 1.0, %v1073
    %v1075 = vmul.f32 %v1072, %v1074
    %v1076 = vadd.f32 %v1072, %v1075
    %vm1077 = vweird.f32 %v1038
    %vm1078 = vweird.f32 %v1072
    %vm1079 = vmor %vm1077, %vm1078
    %v1080 = vsel %vm1079, %v1072, %v1076
    %v1081 = vand.u32 2147483647, %v1038
    %vm1082 = vcmp.eq.f32.partialorder %v1081, 8.507059e+37
    %v1083 = vand.u32 %v1038, 2147483648
    %v1084 = vor.u32 1.1754944e-38, %v1083
    %v1085 = vsel %vm1082, %v1084, %v1080
    %v1086 = vmul.f32 %v1020, %v1085
    %v1087 = vrcp.pop %v1041
    %v1088 = vmul.f32 %v1041, %v1087
    %v1089 = vsub.f32 1.0, %v1088
    %v1090 = vmul.f32 %v1087, %v1089
    %v1091 = vadd.f32 %v1087, %v1090
    %vm1092 = vweird.f32 %v1041
    %vm1093 = vweird.f32 %v1087
    %vm1094 = vmor %vm1092, %vm1093
    %v1095 = vsel %vm1094, %v1087, %v1091
    %v1096 = vand.u32 2147483647, %v1041
    %vm1097 = vcmp.eq.f32.partialorder %v1096, 8.507059e+37
    %v1098 = vand.u32 %v1041, 2147483648
    %v1099 = vor.u32 1.1754944e-38, %v1098
    %v1100 = vsel %vm1097, %v1099, %v1095
    %v1101 = vmul.f32 %v1022, %v1100
    %v1102 = vrcp.pop %v1044
    %v1103 = vmul.f32 %v1044, %v1102
    %v1104 = vsub.f32 1.0, %v1103
    %v1105 = vmul.f32 %v1102, %v1104
    %v1106 = vadd.f32 %v1102, %v1105
    %vm1107 = vweird.f32 %v1044
    %vm1108 = vweird.f32 %v1102
    %vm1109 = vmor %vm1107, %vm1108
    %v1110 = vsel %vm1109, %v1102, %v1106
    %v1111 = vand.u32 2147483647, %v1044
    %vm1112 = vcmp.eq.f32.partialorder %v1111, 8.507059e+37
    %v1113 = vand.u32 %v1044, 2147483648
    %v1114 = vor.u32 1.1754944e-38, %v1113
    %v1115 = vsel %vm1112, %v1114, %v1110
    %v1116 = vmul.f32 %v1024, %v1115
    %v1117 = vrcp.pop %v1047
    %v1118 = vmul.f32 %v1047, %v1117
    %v1119 = vsub.f32 1.0, %v1118
    %v1120 = vmul.f32 %v1117, %v1119
    %v1121 = vadd.f32 %v1117, %v1120
    %vm1122 = vweird.f32 %v1047
    %vm1123 = vweird.f32 %v1117
    %vm1124 = vmor %vm1122, %vm1123
    %v1125 = vsel %vm1124, %v1117, %v1121
    %v1126 = vand.u32 2147483647, %v1047
    %vm1127 = vcmp.eq.f32.partialorder %v1126, 8.507059e+37
    %v1128 = vand.u32 %v1047, 2147483648
    %v1129 = vor.u32 1.1754944e-38, %v1128
    %v1130 = vsel %vm1127, %v1129, %v1125
    %v1131 = vmul.f32 %v1026, %v1130
    %v1132 = vrcp.pop %v1050
    %v1133 = vmul.f32 %v1050, %v1132
    %v1134 = vsub.f32 1.0, %v1133
    %v1135 = vmul.f32 %v1132, %v1134
    %v1136 = vadd.f32 %v1132, %v1135
    %vm1137 = vweird.f32 %v1050
    %vm1138 = vweird.f32 %v1132
    %vm1139 = vmor %vm1137, %vm1138
    %v1140 = vsel %vm1139, %v1132, %v1136
    %v1141 = vand.u32 2147483647, %v1050
    %vm1142 = vcmp.eq.f32.partialorder %v1141, 8.507059e+37
    %v1143 = vand.u32 %v1050, 2147483648
    %v1144 = vor.u32 1.1754944e-38, %v1143
    %v1145 = vsel %vm1142, %v1144, %v1140
    %v1146 = vmul.f32 %v1028, %v1145
    %v1147 = vrcp.pop %v1053
    %v1148 = vmul.f32 %v1053, %v1147
    %v1149 = vsub.f32 1.0, %v1148
    %v1150 = vmul.f32 %v1147, %v1149
    %v1151 = vadd.f32 %v1147, %v1150
    %vm1152 = vweird.f32 %v1053
    %vm1153 = vweird.f32 %v1147
    %vm1154 = vmor %vm1152, %vm1153
    %v1155 = vsel %vm1154, %v1147, %v1151
    %v1156 = vand.u32 2147483647, %v1053
    %vm1157 = vcmp.eq.f32.partialorder %v1156, 8.507059e+37
    %v1158 = vand.u32 %v1053, 2147483648
    %v1159 = vor.u32 1.1754944e-38, %v1158
    %v1160 = vsel %vm1157, %v1159, %v1155
    %v1161 = vmul.f32 %v1030, %v1160
    %v1162 = vrcp.pop %v1056
    %v1163 = vmul.f32 %v1056, %v1162
    %v1164 = vsub.f32 1.0, %v1163
    %v1165 = vmul.f32 %v1162, %v1164
    %v1166 = vadd.f32 %v1162, %v1165
    %vm1167 = vweird.f32 %v1056
    %vm1168 = vweird.f32 %v1162
    %vm1169 = vmor %vm1167, %vm1168
    %v1170 = vsel %vm1169, %v1162, %v1166
    %v1171 = vand.u32 2147483647, %v1056
    %vm1172 = vcmp.eq.f32.partialorder %v1171, 8.507059e+37
    %v1173 = vand.u32 %v1056, 2147483648
    %v1174 = vor.u32 1.1754944e-38, %v1173
    %v1175 = vsel %vm1172, %v1174, %v1170
    %v1176 = vmul.f32 %v1032, %v1175
    %v1177 = vpack.c.bf16 %v757, %v757
    %v1178 = vpack.c.bf16 %v758, %v758
    %v1179 = vpack.c.bf16 %v759, %v759
    %v1180 = vpack.c.bf16 %v760, %v760
    %v1181 = vpack.c.bf16 %v1071, %v1071
    %v1182 = vpack.c.bf16 %v1086, %v1086
    %v1183 = vpack.c.bf16 %v1101, %v1101
    %v1184 = vpack.c.bf16 %v1116, %v1116
    %v1185 = vpack.c.bf16 %v1131, %v1131
    %v1186 = vpack.c.bf16 %v1146, %v1146
    %v1187 = vpack.c.bf16 %v1161, %v1161
    %v1188 = vpack.c.bf16 %v1176, %v1176
    %v1191 = vunpack.c.l.b16 %v1181
    %v1192 = vunpack.c.l.b16 %v1182
    %v1193 = vpack.c.b16 %v1192, %v1191
    %v1195 = vsel %vm290, %v1177, 0
    %v1198 = vsel %vm290, %v1193, 0
    %1200 = vmatpush.bf16.xpose.msra.mxu0 0
    %1201 = vmatpush.bf16.xpose.msra.mxu0 0
    %1202 = vmatpush.bf16.xpose.msra.mxu0 0
    %1203 = vmatpush.bf16.xpose.msra.mxu0 0
    %1204 = vmatpush.bf16.xpose.msra.mxu0 0
    %1205 = vmatpush.bf16.xpose.msra.mxu0 0
    %1206 = vmatpush.bf16.xpose.msra.mxu0 0
    %1207 = vmatpush.bf16.xpose.msra.mxu0 %v1198
    %1208 = vmatmul.bf16.gmra.mxu0 %v1195
    %v1209 = vpop.f32.mrf.mxu0
    %v1210 = vadd.f32 0.0, %v1209
    %v1211 = vpop.f32.mrf.mxu0
    %1212 = vdwg.mxu0
    %v1215 = vunpack.c.l.b16 %v1183
    %v1216 = vunpack.c.l.b16 %v1184
    %v1217 = vpack.c.b16 %v1216, %v1215
    %v1219 = vsel %vm290, %v1178, 0
    %v1222 = vsel %vm290, %v1217, 0
    %1224 = vmatpush.bf16.xpose.msra.mxu0 0
    %1225 = vmatpush.bf16.xpose.msra.mxu0 0
    %1226 = vmatpush.bf16.xpose.msra.mxu0 0
    %1227 = vmatpush.bf16.xpose.msra.mxu0 0
    %1228 = vmatpush.bf16.xpose.msra.mxu0 0
    %1229 = vmatpush.bf16.xpose.msra.mxu0 0
    %1230 = vmatpush.bf16.xpose.msra.mxu0 0
    %1231 = vmatpush.bf16.xpose.msra.mxu0 %v1222
    %1232 = vmatmul.bf16.gmra.mxu0 %v1219
    %v1233 = vpop.f32.mrf.mxu0
    %v1234 = vadd.f32 0.0, %v1233
    %v1235 = vpop.f32.mrf.mxu0
    %1236 = vdwg.mxu0
    %v1239 = vunpack.c.l.b16 %v1185
    %v1240 = vunpack.c.l.b16 %v1186
    %v1241 = vpack.c.b16 %v1240, %v1239
    %v1243 = vsel %vm290, %v1179, 0
    %v1246 = vsel %vm290, %v1241, 0
    %1248 = vmatpush.bf16.xpose.msra.mxu0 0
    %1249 = vmatpush.bf16.xpose.msra.mxu0 0
    %1250 = vmatpush.bf16.xpose.msra.mxu0 0
    %1251 = vmatpush.bf16.xpose.msra.mxu0 0
    %1252 = vmatpush.bf16.xpose.msra.mxu0 0
    %1253 = vmatpush.bf16.xpose.msra.mxu0 0
    %1254 = vmatpush.bf16.xpose.msra.mxu0 0
    %1255 = vmatpush.bf16.xpose.msra.mxu0 %v1246
    %1256 = vmatmul.bf16.gmra.mxu0 %v1243
    %v1257 = vpop.f32.mrf.mxu0
    %v1258 = vadd.f32 0.0, %v1257
    %v1259 = vpop.f32.mrf.mxu0
    %1260 = vdwg.mxu0
    %v1263 = vunpack.c.l.b16 %v1187
    %v1264 = vunpack.c.l.b16 %v1188
    %v1265 = vpack.c.b16 %v1264, %v1263
    %v1267 = vsel %vm290, %v1180, 0
    %v1270 = vsel %vm290, %v1265, 0
    %1272 = vmatpush.bf16.xpose.msra.mxu0 0
    %1273 = vmatpush.bf16.xpose.msra.mxu0 0
    %1274 = vmatpush.bf16.xpose.msra.mxu0 0
    %1275 = vmatpush.bf16.xpose.msra.mxu0 0
    %1276 = vmatpush.bf16.xpose.msra.mxu0 0
    %1277 = vmatpush.bf16.xpose.msra.mxu0 0
    %1278 = vmatpush.bf16.xpose.msra.mxu0 0
    %1279 = vmatpush.bf16.xpose.msra.mxu0 %v1270
    %1280 = vmatmul.bf16.gmra.mxu0 %v1267
    %v1281 = vpop.f32.mrf.mxu0
    %v1282 = vadd.f32 0.0, %v1281
    %v1283 = vpop.f32.mrf.mxu0
    %1284 = vdwg.mxu0
    %v1285 = vpack.c.bf16 %v1234, %v1210
    %v1286 = vpack.c.bf16 %v1282, %v1258
    %v1287 = vld [vmem:[%s2 + $0x60] sm:$0xf]
    %v1288 = vld [vmem:[%s2 + $0x68] sm:$0xf]
    %v1289 = vld [vmem:[%s2 + $0x70] sm:$0xf]
    %v1290 = vld [vmem:[%s2 + $0x78] sm:$0xf]
    %v1291 = vld [vmem:[%s3 + $0x3] ss:$0 sm:$0xff]
    %1292 = vxpose.xlu0.c.b16.start [1/8] %v1285, 128
    %1293 = vxpose.xlu0.c.b16.cont [2/8] %v1286, 128
    %1294 = vxpose.xlu0.c.b16.cont [3/8] 0, 128
    %1295 = vxpose.xlu0.c.b16.cont [4/8] 0, 128
    %1296 = vxpose.xlu0.c.b16.cont [5/8] 0, 128
    %1297 = vxpose.xlu0.c.b16.cont [6/8] 0, 128
    %1298 = vxpose.xlu0.c.b16.cont [7/8] 0, 128
    %1299 = vxpose.xlu0.c.b16.end [8/8] 0, 128
    %v1300 = vpop.trf.xlu0
    %v1301 = vpop.trf.xlu0
    %v1302 = vpop.trf.xlu0
    %v1303 = vpop.trf.xlu0
    %v1304 = vpop.trf.xlu0
    %v1305 = vpop.trf.xlu0
    %v1306 = vpop.trf.xlu0
    %v1307 = vpop.trf.xlu0
    %v1312 = vunpack.c.l.b16 %v1287
    %v1313 = vunpack.c.l.b16 %v1288
    %v1314 = vunpack.c.l.b16 %v1289
    %v1315 = vunpack.c.l.b16 %v1290
    %v1316 = vpack.c.b16 %v1313, %v1312
    %v1317 = vpack.c.b16 %v1315, %v1314
    %v1321 = vsel %vm63, %v1300, 0
    %1323 = vmatpush.bf16.msra.mxu0 0
    %1324 = vmatpush.bf16.msra.mxu0 0
    %1325 = vmatpush.bf16.msra.mxu0 0
    %1326 = vmatpush.bf16.msra.mxu0 0
    %1327 = vmatpush.bf16.msra.mxu0 0
    %1328 = vmatpush.bf16.msra.mxu0 0
    %1329 = vmatpush.bf16.msra.mxu0 %v1317
    %1330 = vmatpush.bf16.msra.mxu0 %v1316
    %1331 = vmatmul.bf16.gmra.mxu0 %v1321
    %v1332 = vpop.f32.mrf.mxu0
    %v1333 = vadd.f32 %v1291, %v1332
    %v1334 = vpop.f32.mrf.mxu0
    %v1335 = vadd.f32 %v1291, %v1334
    %1336 = vdwg.mxu0
    %v1337 = vadd.f32 %v700, %v1333
    %v1338 = vadd.f32 %v701, %v1335
    %v1339 = vld [vmem:[%s3 + $0x10] ss:$0 sm:$0xff]
    %v1340 = vld [vmem:[%s3 + $0x11] ss:$0 sm:$0xff]
    %v1341 = vsel %vm63, %v1337, 0.0
    %1342 = vadd.xlane.f32.xlu0 %v1341
    %v1343 = vpop.xlane.xlu0 %1342
    %v1344 = vsel %vm63, %v1338, 0.0
    %1345 = vadd.xlane.f32.xlu0 %v1344
    %v1346 = vpop.xlane.xlu0 %1345
    %v1347 = vmul.f32 %v1343, %v659
    %v1348 = vmul.f32 %v1346, %v659
    %v1349 = vsub.f32 %v1337, %v1347
    %v1350 = vsub.f32 %v1338, %v1348
    %v1351 = vmul.f32 %v1349, %v1349
    %v1352 = vmul.f32 %v1350, %v1350
    %v1353 = vsel %vm63, %v1351, 0.0
    %1354 = vadd.xlane.f32.xlu0 %v1353
    %v1355 = vpop.xlane.xlu0 %1354
    %v1356 = vsel %vm63, %v1352, 0.0
    %1357 = vadd.xlane.f32.xlu0 %v1356
    %v1358 = vpop.xlane.xlu0 %1357
    %v1359 = vmul.f32 %v1355, %v659
    %v1360 = vmul.f32 %v1358, %v659
    %v1361 = vadd.f32 %v1359, 1e-05
    %v1362 = vadd.f32 %v1360, 1e-05
    %v1363 = vrsqrt.pop %v1361
    %v1364 = vmul.f32 %v1363, %v1361
    %v1365 = vmul.f32 %v1364, %v1363
    %v1366 = vmul.f32 0.5, %v1365
    %v1367 = vsub.f32 1.5, %v1366
    %v1368 = vmul.f32 %v1363, %v1367
    %vm1369 = vweird.f32 %v1361
    %vm1370 = vweird.f32 %v1363
    %vm1371 = vmor %vm1369, %vm1370
    %v1372 = vsel %vm1371, %v1363, %v1368
    %v1373 = vrsqrt.pop %v1362
    %v1374 = vmul.f32 %v1373, %v1362
    %v1375 = vmul.f32 %v1374, %v1373
    %v1376 = vmul.f32 0.5, %v1375
    %v1377 = vsub.f32 1.5, %v1376
    %v1378 = vmul.f32 %v1373, %v1377
    %vm1379 = vweird.f32 %v1362
    %vm1380 = vweird.f32 %v1373
    %vm1381 = vmor %vm1379, %vm1380
    %v1382 = vsel %vm1381, %v1373, %v1378
    %v1383 = vmul.f32 %v1349, %v1372
    %v1384 = vmul.f32 %v1350, %v1382
    %v1385 = vmul.f32 %v1383, %v1339
    %v1386 = vmul.f32 %v1384, %v1339
    %v1387 = vadd.f32 %v1385, %v1340
    %v1388 = vadd.f32 %v1386, %v1340
    %v1389 = vpack.c.bf16 %v1388, %v1387
    %v1390 = vld [vmem:[%s2 + $0x80] sm:$0xf]
    %v1391 = vld [vmem:[%s2 + $0x88] sm:$0xf]
    %v1392 = vld [vmem:[%s2 + $0x90] sm:$0xf]
    %v1393 = vld [vmem:[%s2 + $0x98] sm:$0xf]
    %v1394 = vld [vmem:[%s3 + $0x4] ss:$0 sm:$0xff]
    %v1399 = vunpack.c.l.b16 %v1390
    %v1400 = vunpack.c.l.b16 %v1391
    %v1401 = vunpack.c.l.b16 %v1392
    %v1402 = vunpack.c.l.b16 %v1393
    %v1403 = vpack.c.b16 %v1400, %v1399
    %v1404 = vpack.c.b16 %v1402, %v1401
    %v1408 = vsel %vm63, %v1389, 0
    %1410 = vmatpush.bf16.msra.mxu0 0
    %1411 = vmatpush.bf16.msra.mxu0 0
    %1412 = vmatpush.bf16.msra.mxu0 0
    %1413 = vmatpush.bf16.msra.mxu0 0
    %1414 = vmatpush.bf16.msra.mxu0 0
    %1415 = vmatpush.bf16.msra.mxu0 0
    %1416 = vmatpush.bf16.msra.mxu0 %v1404
    %1417 = vmatpush.bf16.msra.mxu0 %v1403
    %1418 = vmatmul.bf16.gmra.mxu0 %v1408
    %v1419 = vpop.f32.mrf.mxu0
    %v1420 = vadd.f32 %v1394, %v1419
    %v1421 = vpop.f32.mrf.mxu0
    %v1422 = vadd.f32 %v1394, %v1421
    %1423 = vdwg.mxu0
    %v1424 = vmax.f32 %v1420, 0.0
    %v1425 = vmax.f32 %v1422, 0.0
    %v1426 = vpack.c.bf16 %v1425, %v1424
    %v1427 = vld [vmem:[%s2 + $0xa0] sm:$0xf]
    %v1428 = vld [vmem:[%s2 + $0xa8] sm:$0xf]
    %v1429 = vld [vmem:[%s2 + $0xb0] sm:$0xf]
    %v1430 = vld [vmem:[%s2 + $0xb8] sm:$0xf]
    %v1431 = vld [vmem:[%s2 + $0xc0] sm:$0xf]
    %v1432 = vld [vmem:[%s2 + $0xc8] sm:$0xf]
    %v1433 = vld [vmem:[%s2 + $0xd0] sm:$0xf]
    %v1434 = vld [vmem:[%s2 + $0xd8] sm:$0xf]
    %v1435 = vld [vmem:[%s3 + $0x5] ss:$0 sm:$0xff]
    %v1444 = vunpack.c.l.b16 %v1427
    %v1445 = vunpack.c.l.b16 %v1428
    %v1446 = vunpack.c.l.b16 %v1429
    %v1447 = vunpack.c.l.b16 %v1430
    %v1448 = vunpack.c.l.b16 %v1431
    %v1449 = vunpack.c.l.b16 %v1432
    %v1450 = vunpack.c.l.b16 %v1433
    %v1451 = vunpack.c.l.b16 %v1434
    %v1452 = vpack.c.b16 %v1445, %v1444
    %v1453 = vpack.c.b16 %v1447, %v1446
    %v1454 = vpack.c.b16 %v1449, %v1448
    %v1455 = vpack.c.b16 %v1451, %v1450
    %vm1460 = vcmask 523264
    %v1462 = vsel %vm1460, %v1426, 0
    %1464 = vmatpush.bf16.msra.mxu0 0
    %1465 = vmatpush.bf16.msra.mxu0 0
    %1466 = vmatpush.bf16.msra.mxu0 0
    %1467 = vmatpush.bf16.msra.mxu0 0
    %1468 = vmatpush.bf16.msra.mxu0 %v1455
    %1469 = vmatpush.bf16.msra.mxu0 %v1454
    %1470 = vmatpush.bf16.msra.mxu0 %v1453
    %1471 = vmatpush.bf16.msra.mxu0 %v1452
    %1472 = vmatmul.bf16.gmra.mxu0 %v1462
    %v1473 = vpop.f32.mrf.mxu0
    %v1474 = vadd.f32 %v1435, %v1473
    %v1475 = vpop.f32.mrf.mxu0
    %v1476 = vadd.f32 %v1435, %v1475
    %1477 = vdwg.mxu0
    %v1478 = vadd.f32 %v1387, %v1474
    %v1479 = vadd.f32 %v1388, %v1476
    %v1480 = vld [vmem:[%s3 + $0x12] ss:$0 sm:$0xff]
    %v1481 = vld [vmem:[%s3 + $0x13] ss:$0 sm:$0xff]
    %v1482 = vsel %vm63, %v1478, 0.0
    %1483 = vadd.xlane.f32.xlu0 %v1482
    %v1484 = vpop.xlane.xlu0 %1483
    %v1485 = vsel %vm63, %v1479, 0.0
    %1486 = vadd.xlane.f32.xlu0 %v1485
    %v1487 = vpop.xlane.xlu0 %1486
    %v1488 = vmul.f32 %v1484, %v659
    %v1489 = vmul.f32 %v1487, %v659
    %v1490 = vsub.f32 %v1478, %v1488
    %v1491 = vsub.f32 %v1479, %v1489
    %v1492 = vmul.f32 %v1490, %v1490
    %v1493 = vmul.f32 %v1491, %v1491
    %v1494 = vsel %vm63, %v1492, 0.0
    %1495 = vadd.xlane.f32.xlu0 %v1494
    %v1496 = vpop.xlane.xlu0 %1495
    %v1497 = vsel %vm63, %v1493, 0.0
    %1498 = vadd.xlane.f32.xlu0 %v1497
    %v1499 = vpop.xlane.xlu0 %1498
    %v1500 = vmul.f32 %v1496, %v659
    %v1501 = vmul.f32 %v1499, %v659
    %v1502 = vadd.f32 %v1500, 1e-05
    %v1503 = vadd.f32 %v1501, 1e-05
    %v1504 = vrsqrt.pop %v1502
    %v1505 = vmul.f32 %v1504, %v1502
    %v1506 = vmul.f32 %v1505, %v1504
    %v1507 = vmul.f32 0.5, %v1506
    %v1508 = vsub.f32 1.5, %v1507
    %v1509 = vmul.f32 %v1504, %v1508
    %vm1510 = vweird.f32 %v1502
    %vm1511 = vweird.f32 %v1504
    %vm1512 = vmor %vm1510, %vm1511
    %v1513 = vsel %vm1512, %v1504, %v1509
    %v1514 = vrsqrt.pop %v1503
    %v1515 = vmul.f32 %v1514, %v1503
    %v1516 = vmul.f32 %v1515, %v1514
    %v1517 = vmul.f32 0.5, %v1516
    %v1518 = vsub.f32 1.5, %v1517
    %v1519 = vmul.f32 %v1514, %v1518
    %vm1520 = vweird.f32 %v1503
    %vm1521 = vweird.f32 %v1514
    %vm1522 = vmor %vm1520, %vm1521
    %v1523 = vsel %vm1522, %v1514, %v1519
    %v1524 = vmul.f32 %v1490, %v1513
    %v1525 = vmul.f32 %v1491, %v1523
    %v1526 = vmul.f32 %v1524, %v1480
    %v1527 = vmul.f32 %v1525, %v1480
    %v1528 = vadd.f32 %v1526, %v1481
    %v1529 = vadd.f32 %v1527, %v1481
    %1530 = vst.msk [vmem:[#allocation2] sm:$0xff] %vm63, %v1528
    %1531 = vst.msk [vmem:[#allocation2 + $0x10] sm:$0xff] %vm63, %v1529
    %1534 = vrot.lane.b32.xlu0 %v377, 32
    %v1535 = vpop.permute.xlu0 %1534
    %1536 = vrot.lane.b32.xlu0 %v392, 32
    %v1537 = vpop.permute.xlu0 %1536
    %vm1540 = vcmask 392448
    %1541 = vst.msk [vmem:[#allocation2] sm:$0xff] %vm1540, %v1535
    %1542 = vst.msk [vmem:[#allocation2 + $0x10] sm:$0xff] %vm1540, %v1537
    %1545 = vrot.lane.b32.xlu0 %v1071, 96
    %v1546 = vpop.permute.xlu0 %1545
    %1547 = vrot.lane.b32.xlu0 %v1086, 96
    %v1548 = vpop.permute.xlu0 %1547
    %vm1551 = vcmask 917248
    %1552 = vst.msk [vmem:[#allocation2] sm:$0xff] %vm1551, %v1546
    %1553 = vst.msk [vmem:[#allocation2 + $0x10] sm:$0xff] %vm1551, %v1548
    %1556 = vrot.lane.b32.xlu0 %v407, 48
    %v1557 = vpop.permute.xlu0 %1556
    %1558 = vrot.lane.b32.xlu0 %v422, 48
    %v1559 = vpop.permute.xlu0 %1558
    %vm1562 = vcmask 523648
    %1563 = vst.msk [vmem:[#allocation2] sm:$0xff] %vm1562, %v1557
    %1564 = vst.msk [vmem:[#allocation2 + $0x10] sm:$0xff] %vm1562, %v1559
    %1567 = vrot.lane.b32.xlu0 %v1101, 112
    %v1568 = vpop.permute.xlu0 %1567
    %1569 = vrot.lane.b32.xlu0 %v1116, 112
    %v1570 = vpop.permute.xlu0 %1569
    %vm1573 = vcmask 1048448
    %1574 = vst.msk [vmem:[#allocation2] sm:$0xff] %vm1573, %v1568
    %1575 = vst.msk [vmem:[#allocation2 + $0x10] sm:$0xff] %vm1573, %v1570
    %1578 = vrot.lane.b32.xlu0 %v437, 64
    %v1579 = vpop.permute.xlu0 %1578
    %1580 = vrot.lane.b32.xlu0 %v452, 64
    %v1581 = vpop.permute.xlu0 %1580
    %vm1584 = vcmask 654848
    %1585 = vst.msk [vmem:[#allocation2] sm:$0xff] %vm1584, %v1579
    %1586 = vst.msk [vmem:[#allocation2 + $0x10] sm:$0xff] %vm1584, %v1581
    %1587 = vst.msk [vmem:[#allocation2 + $0x8] sm:$0xff] %vm290, %v1131
    %1588 = vst.msk [vmem:[#allocation2 + $0x18] sm:$0xff] %vm290, %v1146
    %1591 = vrot.lane.b32.xlu0 %v467, 80
    %v1592 = vpop.permute.xlu0 %1591
    %1593 = vrot.lane.b32.xlu0 %v482, 80
    %v1594 = vpop.permute.xlu0 %1593
    %vm1597 = vcmask 786048
    %1598 = vst.msk [vmem:[#allocation2] sm:$0xff] %vm1597, %v1592
    %1599 = vst.msk [vmem:[#allocation2 + $0x10] sm:$0xff] %vm1597, %v1594
    %1602 = vrot.lane.b32.xlu0 %v1161, 16
    %v1603 = vpop.permute.xlu0 %1602
    %1604 = vrot.lane.b32.xlu0 %v1176, 16
    %v1605 = vpop.permute.xlu0 %1604
    %vm1608 = vcmask 261248
    %1609 = vst.msk [vmem:[#allocation2 + $0x8] sm:$0xff] %vm1608, %v1603
    %1610 = vst.msk [vmem:[#allocation2 + $0x18] sm:$0xff] %vm1608, %v1605
    // Predicated region
    $region18: #{tpu_custom_call.1} parent=1 // pred_check
      _
    $region19: #{tpu_custom_call.1} parent=1 // pred_check_branch
      %1612 = sbr.rel (0) target = $region21
    $region20: #{tpu_custom_call.1} parent=1 // pred_region
      %1614 = vsyncadd [#allocation3], 0
      %s1615 = sshll.u32 [#allocation2], 4
      %s1616 = int_to_ptr.vmem [resolvable:$true] %s1615
      %s1617 = sshll.u32 %s4, 4
      %s1618 = int_to_ptr.hbm [resolvable:$true] %s1617
      %1623 = dma.vmem_to_hbm [thread:$0]  %s1616, 512, %s1618, [#allocation3], 256, 256, 16
    $region21: #{tpu_custom_call.1} parent=1 // pred_fallthru
      _
    // Predicated region
    $region22: #{tpu_custom_call.1} parent=1 // pred_check
      _
    $region23: #{tpu_custom_call.1} parent=1 // pred_check_branch
      %1625 = sbr.rel (0) target = $region25
    $region24: #{tpu_custom_call.1} parent=1 // pred_region
      %1627 = dma.done [#allocation3], 512
    $region25: #{tpu_custom_call.1} parent=1 // pred_fallthru
      _
    %1628 = vsyncpa [#allocation3], 1

</llo_original>
